<compile_context>
chip_gen: v6e
topology: v6e:2x2x1
jax: 0.10.0
libtpu: 0.0.40
codegen_flags: <defaults>
</compile_context>

<pallas_src>
import numpy as np
import jax
import jax.numpy as jnp
from jax import lax
from jax.experimental import pallas as pl
from jax.experimental.pallas import tpu as pltpu

# ----------------------------------------------------------------------------
# Hyper-parameters consistent with MegaEncoderLayer's args
# ----------------------------------------------------------------------------
SEQ_LEN   = 8     # L
BATCH     = 2     # B
EMBED_DIM = 32    # D  (args.encoder_embed_dim)
Z_DIM     = 16    # Z  (args.encoder_z_dim)
H_DIM     = 64    # H  (args.encoder_hidden_dim)
N_DIM     = 2     # N  (args.encoder_n_dim, EMA order)
FFN_DIM   = 64    # F  (args.encoder_ffn_embed_dim)
MAX_POS   = 64    # args.max_source_positions
LN_EPS    = 1e-5
ATTN_SCALE = Z_DIM ** -0.5
NEG_INF   = -1e30

# Fused u/z/hx/r projection column layout (no result slice crosses a 128-lane
# vreg group): u:[0,32) z:[32,48) hx:[48,80) pad r:[128,192).
COL_U, COL_Z, COL_HX, COL_R = 0, EMBED_DIM, EMBED_DIM + Z_DIM, 128
FUSED_COLS = COL_R + H_DIM                       # 192

# wa column layout: w_uzrh [0,192) | w1 [192,256) | wv [256,320)
WA_COLS = FUSED_COLS + FFN_DIM + H_DIM           # 320
# wb column layout: wh [0,32) | w2 [32,64)
WB_COLS = 2 * EMBED_DIM                          # 64

# Rows of the packed small-vector / mask slab (one (32, 256) f32 array).
(R_LN1G, R_LN1B, R_OMEGA, R_BV, R_BUZRH, R_QG0, R_QG1, R_QB0, R_QB1,
 R_BH, R_LN2G, R_LN2B, R_B1, R_B2) = range(14)
R_MASK = 16                # rows [16, 16+BL): cols [0,BL) mask, cols [128,128+D) keep
VEC_ROWS, VEC_COLS = 32, 256
KEEP_COL = 128


# ----------------------------------------------------------------------------
# Shared math helpers
# ----------------------------------------------------------------------------
def _layer_norm(x, g, b):
    mu = jnp.mean(x, axis=-1, keepdims=True)
    xc = x - mu
    var = jnp.mean(xc * xc, axis=-1, keepdims=True)
    return xc * lax.rsqrt(var + LN_EPS) * g + b


# ----------------------------------------------------------------------------
# Pallas kernel: full MegaEncoderLayer forward for the whole (B*L, D) slab
# ----------------------------------------------------------------------------
def mega_encoder_kernel(x_ref, vec_ref, wa_ref, wb_ref, c3_ref, o_ref):
    B, L, D, Z, H, F = BATCH, SEQ_LEN, EMBED_DIM, Z_DIM, H_DIM, FFN_DIM
    BL = B * L
    bf = jnp.bfloat16

    # ---- unpack the packed small-vector slab (one DMA, static slices) ------
    V = vec_ref[...]
    ln1_g = V[R_LN1G:R_LN1G + 1, :D]
    ln1_b = V[R_LN1B:R_LN1B + 1, :D]
    omega = V[R_OMEGA:R_OMEGA + 1, :D]
    bv    = V[R_BV:R_BV + 1, :H]
    buzrh = V[R_BUZRH:R_BUZRH + 1, :FUSED_COLS]
    qg0   = V[R_QG0:R_QG0 + 1, :Z]          # ATTN_SCALE folded in at pack time
    qg1   = V[R_QG1:R_QG1 + 1, :Z]
    qb0   = V[R_QB0:R_QB0 + 1, :Z]          # ATTN_SCALE folded in at pack time
    qb1   = V[R_QB1:R_QB1 + 1, :Z]
    bh    = V[R_BH:R_BH + 1, :D]
    ln2_g = V[R_LN2G:R_LN2G + 1, :D]
    ln2_b = V[R_LN2B:R_LN2B + 1, :D]
    b1    = V[R_B1:R_B1 + 1, :F]
    b2    = V[R_B2:R_B2 + 1, :D]
    mask  = V[R_MASK:R_MASK + BL, :BL]                    # (BL, BL) additive mask
    keep  = V[R_MASK:R_MASK + BL, KEEP_COL:KEEP_COL + D]  # (BL, D) 1-padding mask

    # ---- unpack merged bf16 weight slabs (static lane slices, free) --------
    wa = wa_ref[...]
    w_uzrh = wa[:, :FUSED_COLS]
    w1     = wa[:, FUSED_COLS:FUSED_COLS + F]
    wv     = wa[:, FUSED_COLS + F:FUSED_COLS + F + H]
    wb = wb_ref[...]
    wh = wb[:, :D]
    w2 = wb[:, D:2 * D]

    x = x_ref[...]                                   # (BL, D) f32
    residual = x
    xn = _layer_norm(x, ln1_g, ln1_b)                # prenorm

    # ---- value projection (bf16 MXU operands, f32 accumulate) --------------
    v = jax.nn.silu(jnp.dot(xn.astype(bf), wv,
                            preferred_element_type=jnp.float32) + bv)   # (BL,H)

    # ---- bidirectional MultiHeadEMA (direct conv, unrolled over source) ----
    # ema[b,t,:] = sum_s keep[b,s] * xn[b,s,:] * c3[s,t,:]; only (B,L,D) live.
    xm = (xn * keep).reshape(B, L, D)
    C3 = c3_ref[...]                                 # (L, L, D)
    ema = xm[:, 0:1, :] * C3[0][None, :, :]
    for s in range(1, L):
        ema = ema + xm[:, s:s + 1, :] * C3[s][None, :, :]
    mx = jax.nn.silu(ema.reshape(BL, D) + xn * omega)                    # (BL,D)

    # ---- fused u / z / hx / r projection ------------------------------------
    uzrh = jnp.dot(mx.astype(bf), w_uzrh,
                   preferred_element_type=jnp.float32) + buzrh           # (BL,192)
    u  = jax.nn.sigmoid(uzrh[:, COL_U:COL_U + D])
    z  = jax.nn.silu(uzrh[:, COL_Z:COL_Z + Z])
    hx = uzrh[:, COL_HX:COL_HX + D]
    r  = jax.nn.silu(uzrh[:, COL_R:COL_R + H])

    # ---- softmax attention: two plain 2-D matmuls + precomputed mask -------
    q = z * qg0 + qb0                                # scale already folded in
    k = z * qg1 + qb1
    qk = jnp.dot(q.astype(bf), k.astype(bf).T,
                 preferred_element_type=jnp.float32) + mask              # (BL,BL)
    m = jnp.max(qk, axis=-1, keepdims=True)
    e = jnp.exp(qk - m)
    attn = e * pl.reciprocal(jnp.sum(e, axis=-1, keepdims=True), approx=True)
    h = jnp.dot(attn.astype(bf), v.astype(bf),
                preferred_element_type=jnp.float32)                      # (BL,H)

    # ---- output gate / residual (torch.addcmul) -----------------------------
    hg = jax.nn.silu(hx + jnp.dot((h * r).astype(bf), wh,
                                  preferred_element_type=jnp.float32) + bh)
    out = residual + u * (hg - residual)             # (BL, D)

    # ---- NormalizedFeedForwardNetwork (prenorm) ------------------------------
    yn = _layer_norm(out, ln2_g, ln2_b)
    y = jax.nn.silu(jnp.dot(yn.astype(bf), w1,
                            preferred_element_type=jnp.float32) + b1)
    y = jnp.dot(y.astype(bf), w2, preferred_element_type=jnp.float32) + b2

    o_ref[...] = (y + out).astype(o_ref.dtype)


# ----------------------------------------------------------------------------
# Wrapper: parameter packing + pallas_call plumbing
# ----------------------------------------------------------------------------
def _full_spec(a):
    return pl.BlockSpec(a.shape, lambda i, _nd=a.ndim: (0,) * _nd)


def mega_encoder_layer(x_lbd, padding_mask, params):
    """x_lbd: (L, B, D) f32; padding_mask: (B, L) with 1.0 at padded positions."""
    L, B, D = x_lbd.shape
    Z, H, F = Z_DIM, H_DIM, FFN_DIM
    BL = B * L
    assert BL <= VEC_ROWS - R_MASK and BL <= KEEP_COL, "vec-slab layout assumes BL <= 16"

    x2 = jnp.transpose(x_lbd, (1, 0, 2)).reshape(BL, D).astype(jnp.float32)
    pm = padding_mask.astype(jnp.float32)                          # (B, L)

    # ---- precomputed (BL, BL) additive attention mask -----------------------
    # block-diagonal rel-pos bias, -1e30 cross-batch, -1e30 on padded keys
    # unless ALL keys of that batch are padded (reference skips masking then).
    attn_bias = params["attn_bias"]                                # (L, L)
    allpad = jnp.all(pm > 0.5, axis=1)                             # (B,)
    mask = jnp.full((BL, BL), NEG_INF, jnp.float32)
    for b in range(B):
        keym = (pm[b] > 0.5) & jnp.logical_not(allpad[b])          # (L,)
        blk = jnp.where(keym[None, :], NEG_INF, attn_bias)
        mask = mask.at[b * L:(b + 1) * L, b * L:(b + 1) * L].set(blk)
    keep = jnp.broadcast_to((1.0 - pm).reshape(BL, 1), (BL, D))    # (BL, D)

    # ---- merged bf16 weight slabs -------------------------------------------
    pad_w = jnp.zeros((D, COL_R - (D + Z + D)), jnp.bfloat16)
    w_uzrh = jnp.concatenate(
        [params["wu"], params["wz"], params["whx"], pad_w, params["wr"]], axis=1)
    wa = jnp.concatenate([w_uzrh, params["w1"], params["wv"]], axis=1)  # (D, 320)
    wb = jnp.concatenate([params["wh"], params["w2"]], axis=1)          # (H, 64)

    b_uzrh = jnp.concatenate(
        [params["bu"], params["bz"], params["bhx"],
         jnp.zeros((1, COL_R - (D + Z + D)), jnp.float32), params["br"]], axis=1)

    # ---- packed small-vector / mask slab (one lane-dense f32 array) --------
    qg, qb = params["qk_gamma"], params["qk_beta"]
    rows = [(R_LN1G, params["ln1_g"]), (R_LN1B, params["ln1_b"]),
            (R_OMEGA, params["omega"]), (R_BV, params["bv"]), (R_BUZRH, b_uzrh),
            (R_QG0, qg[0:1] * ATTN_SCALE), (R_QG1, qg[1:2]),
            (R_QB0, qb[0:1] * ATTN_SCALE), (R_QB1, qb[1:2]),
            (R_BH, params["bh"]), (R_LN2G, params["ln2_g"]),
            (R_LN2B, params["ln2_b"]), (R_B1, params["b1"]), (R_B2, params["b2"])]
    vec = jnp.zeros((VEC_ROWS, VEC_COLS), jnp.float32)
    for row, arr in rows:
        flat = jnp.reshape(arr.astype(jnp.float32), (-1,))
        vec = vec.at[row, :flat.shape[0]].set(flat)
    vec = vec.at[R_MASK:R_MASK + BL, :BL].set(mask)
    vec = vec.at[R_MASK:R_MASK + BL, KEEP_COL:KEEP_COL + D].set(keep)

    operands = [x2, vec, wa, wb, params["c3"]]

    flops = (2 * BL * D * (H + FUSED_COLS + F) + 2 * BL * H * D + 2 * BL * F * D
             + 2 * BL * BL * (Z + H) + 2 * B * L * L * D)
    transcendentals = BL * (H + 2 * D + Z + H + F) + BL * BL
    bytes_accessed = int(sum(a.size * a.dtype.itemsize for a in operands)
                         + BL * D * 4)

    out = pl.pallas_call(
        mega_encoder_kernel,
        out_shape=jax.ShapeDtypeStruct((BL, D), jnp.float32),
        grid_spec=pltpu.PrefetchScalarGridSpec(
            num_scalar_prefetch=0,
            grid=(1,),
            in_specs=[_full_spec(a) for a in operands],
            out_specs=pl.BlockSpec((BL, D), lambda i: (0, 0)),
        ),
        compiler_params=pltpu.CompilerParams(
            dimension_semantics=("arbitrary",),
            vmem_limit_bytes=32 * 1024 * 1024),
        cost_estimate=pl.CostEstimate(flops=flops,
                                      transcendentals=transcendentals,
                                      bytes_accessed=bytes_accessed),
    )(*operands)
    return jnp.transpose(out.reshape(B, L, D), (1, 0, 2))         # back to (L, B, D)


# ----------------------------------------------------------------------------
# Deterministic parameter construction (synthetic; shapes from the module init)
# ----------------------------------------------------------------------------
def init_params(key):
    keys = jax.random.split(key, 32)
    kit = iter(keys)

    def nrm(shape, std=0.1):
        return (std * jax.random.normal(next(kit), shape)).astype(jnp.float32)

    def nrm_bf16(shape, std=0.1):        # matmul weights live in bf16
        return nrm(shape, std).astype(jnp.bfloat16)

    D, Z, H, F, L, N = EMBED_DIM, Z_DIM, H_DIM, FFN_DIM, SEQ_LEN, N_DIM
    p = {}
    p["ln1_g"] = jnp.ones((1, D), jnp.float32)
    p["ln1_b"] = jnp.zeros((1, D), jnp.float32)
    p["wv"] = nrm_bf16((D, H)); p["bv"] = nrm((1, H), 0.02)

    # ---- MultiHeadEMA (bidirectional) raw params -> direct-conv tensor ------
    ema_delta = nrm((2 * D, N, 1), 1.0)
    ema_alpha = nrm((2 * D, N, 1), 1.0)
    ema_beta  = nrm((2 * D, N, 1), 0.5)
    ema_gamma = nrm((2 * D, N), 0.5)
    p["omega"] = nrm((1, D), 0.5)
    pp = jax.nn.sigmoid(ema_delta)
    aa = jax.nn.sigmoid(ema_alpha)
    qq = 1.0 - pp * aa
    vander = jnp.arange(L, dtype=jnp.float32)[None, None, :] * jnp.log(qq)   # (2D,N,L)
    kern = (pp * ema_beta) * jnp.exp(vander)
    ema_k = jnp.einsum("dnl,dn->dl", kern, ema_gamma * (1.0 / N) ** 0.5)     # (2D, L)
    k1, k2 = ema_k[:D], ema_k[D:]
    k1t, k2t = k1.T, k2.T                                                    # (lag, D)
    si = np.arange(L)[:, None]
    ti = np.arange(L)[None, :]
    fwd = ti - si                                                            # t - s
    bwd = si - ti                                                            # s - t
    c3 = (jnp.where(jnp.asarray(fwd >= 0)[..., None], k1t[np.clip(fwd, 0, L - 1)], 0.0)
          + jnp.where(jnp.asarray(bwd >= 0)[..., None], k2t[np.clip(bwd, 0, L - 1)], 0.0))
    p["c3"] = c3.astype(jnp.float32)                                         # (S, T, D)

    # ---- mx_proj split into u / z / r / hx columns (in,out) layout ----------
    p["wu"]  = nrm_bf16((D, D)); p["bu"]  = nrm((1, D), 0.02)
    p["wz"]  = nrm_bf16((D, Z)); p["bz"]  = nrm((1, Z), 0.02)
    p["wr"]  = nrm_bf16((D, H)); p["br"]  = nrm((1, H), 0.02)
    p["whx"] = nrm_bf16((D, D)); p["bhx"] = nrm((1, D), 0.02)
    p["qk_gamma"] = nrm((2, Z), 0.25) + 1.0
    p["qk_beta"]  = nrm((2, Z), 0.02)
    # simple relative positional bias -> dense (L, L)
    rel = nrm((2 * MAX_POS - 1,), 0.1)
    idx = MAX_POS - 1 + (np.arange(L)[None, :] - np.arange(L)[:, None])
    p["attn_bias"] = rel[idx].astype(jnp.float32)                            # (L, L)
    p["wh"] = nrm_bf16((H, D)); p["bh"] = nrm((1, D), 0.02)
    # ---- NormalizedFeedForwardNetwork ---------------------------------------
    p["ln2_g"] = jnp.ones((1, D), jnp.float32)
    p["ln2_b"] = jnp.zeros((1, D), jnp.float32)
    p["w1"] = nrm_bf16((D, F)); p["b1"] = nrm((1, F), 0.02)
    p["w2"] = nrm_bf16((F, D)); p["b2"] = nrm((1, D), 0.02)
    return p


# ----------------------------------------------------------------------------
# Pure-JAX reference (f32 math, same bf16-quantized weights) for correctness
# ----------------------------------------------------------------------------
def reference_forward(x_lbd, padding_mask, p):
    f32 = lambda a: a.astype(jnp.float32)
    pm = padding_mask.astype(jnp.float32)                          # (B, L)
    x = jnp.transpose(x_lbd, (1, 0, 2)).astype(jnp.float32)        # (B, L, D)
    residual = x
    xn = _layer_norm(x, p["ln1_g"], p["ln1_b"])
    v = jax.nn.silu(xn @ f32(p["wv"]) + p["bv"])                   # (B, L, H)
    res_ema = xn * p["omega"]
    xm = xn * (1.0 - pm)[:, :, None]
    ema = jnp.einsum("bsd,std->btd", xm, p["c3"])
    mx = jax.nn.silu(ema + res_ema)
    u  = jax.nn.sigmoid(mx @ f32(p["wu"]) + p["bu"])
    z  = jax.nn.silu(mx @ f32(p["wz"]) + p["bz"])
    r  = jax.nn.silu(mx @ f32(p["wr"]) + p["br"])
    hx = mx @ f32(p["whx"]) + p["bhx"]
    q = z * p["qk_gamma"][0] + p["qk_beta"][0]
    k = z * p["qk_gamma"][1] + p["qk_beta"][1]
    qk = jnp.einsum("blz,bmz->blm", q * ATTN_SCALE, k) + p["attn_bias"][None]
    allpad = jnp.all(pm > 0.5, axis=1, keepdims=True)
    keymask = (pm > 0.5) & (~allpad)
    qk = jnp.where(keymask[:, None, :], NEG_INF, qk)
    m = jnp.max(qk, axis=-1, keepdims=True)
    e = jnp.exp(qk - m)
    attn = e / jnp.sum(e, axis=-1, keepdims=True)
    h = jnp.einsum("blm,bmh->blh", attn, v)
    h = jax.nn.silu(hx + (h * r) @ f32(p["wh"]) + p["bh"])
    out = residual + u * (h - residual)
    yn = _layer_norm(out, p["ln2_g"], p["ln2_b"])
    y = jax.nn.silu(yn @ f32(p["w1"]) + p["b1"])
    y = y @ f32(p["w2"]) + p["b2"]
    return jnp.transpose(y + out, (1, 0, 2))                       # (L, B, D)


if __name__ == "__main__":
    root = jax.random.PRNGKey(0)
    kx, kp = jax.random.split(root)
    x = jax.random.normal(kx, (SEQ_LEN, BATCH, EMBED_DIM), jnp.float32)
    padding_mask = jnp.zeros((BATCH, SEQ_LEN), jnp.float32)
    padding_mask = padding_mask.at[1, SEQ_LEN - 2:].set(1.0)       # pad last 2 tokens of batch 1
    params = init_params(kp)

    out = mega_encoder_layer(x, padding_mask, params)
    out = jax.block_until_ready(out)

    ref = reference_forward(x, padding_mask, params)
    np.testing.assert_allclose(np.asarray(out), np.asarray(ref), rtol=3e-2, atol=3e-2)
    assert out.shape == (SEQ_LEN, BATCH, EMBED_DIM)
    print("KERNEL_OK")
</pallas_src>

<mosaic_0001>
module attributes {stable_mosaic.version = 11 : i64} {
  func.func @mega_encoder_kernel(%arg0: i32, %arg1: memref<16x32xf32, #tpu.memory_space<vmem>>, %arg2: memref<32x256xf32, #tpu.memory_space<vmem>>, %arg3: memref<32x320xbf16, #tpu.memory_space<vmem>>, %arg4: memref<64x64xbf16, #tpu.memory_space<vmem>>, %arg5: memref<8x8x32xf32, #tpu.memory_space<vmem>>, %arg6: memref<16x32xf32, #tpu.memory_space<vmem>>) attributes {dimension_semantics = [#tpu.dimension_semantics<arbitrary>], iteration_bounds = array<i64: 1>, scalar_prefetch = 0 : i64, scratch_operands = 0 : i64, tpu.core_type = #tpu.core_type<tc>, window_params = [{pipeline_mode = #tpu.pipeline_mode<synchronous>, transform_indices = @transform_0, window_bounds = array<i64: 16, 32>}, {pipeline_mode = #tpu.pipeline_mode<synchronous>, transform_indices = @transform_1, window_bounds = array<i64: 32, 256>}, {pipeline_mode = #tpu.pipeline_mode<synchronous>, transform_indices = @transform_2, window_bounds = array<i64: 32, 320>}, {pipeline_mode = #tpu.pipeline_mode<synchronous>, transform_indices = @transform_3, window_bounds = array<i64: 64, 64>}, {pipeline_mode = #tpu.pipeline_mode<synchronous>, transform_indices = @transform_4, window_bounds = array<i64: 8, 8, 32>}, {pipeline_mode = #tpu.pipeline_mode<synchronous>, transform_indices = @transform_5, window_bounds = array<i64: 16, 32>}]} {
    %c0 = arith.constant 0 : index
    %c0_0 = arith.constant 0 : index
    %0 = vector.load %arg2[%c0, %c0_0] : memref<32x256xf32, #tpu.memory_space<vmem>>, vector<32x256xf32>
    %1 = vector.extract_strided_slice %0 {offsets = [0, 0], sizes = [1, 32], strides = [1, 1]} : vector<32x256xf32> to vector<1x32xf32>
    %2 = vector.extract_strided_slice %0 {offsets = [1, 0], sizes = [1, 32], strides = [1, 1]} : vector<32x256xf32> to vector<1x32xf32>
    %3 = vector.extract_strided_slice %0 {offsets = [2, 0], sizes = [1, 32], strides = [1, 1]} : vector<32x256xf32> to vector<1x32xf32>
    %4 = vector.extract_strided_slice %0 {offsets = [3, 0], sizes = [1, 64], strides = [1, 1]} : vector<32x256xf32> to vector<1x64xf32>
    %5 = vector.extract_strided_slice %0 {offsets = [4, 0], sizes = [1, 192], strides = [1, 1]} : vector<32x256xf32> to vector<1x192xf32>
    %6 = vector.extract_strided_slice %0 {offsets = [5, 0], sizes = [1, 16], strides = [1, 1]} : vector<32x256xf32> to vector<1x16xf32>
    %7 = vector.extract_strided_slice %0 {offsets = [6, 0], sizes = [1, 16], strides = [1, 1]} : vector<32x256xf32> to vector<1x16xf32>
    %8 = vector.extract_strided_slice %0 {offsets = [7, 0], sizes = [1, 16], strides = [1, 1]} : vector<32x256xf32> to vector<1x16xf32>
    %9 = vector.extract_strided_slice %0 {offsets = [8, 0], sizes = [1, 16], strides = [1, 1]} : vector<32x256xf32> to vector<1x16xf32>
    %10 = vector.extract_strided_slice %0 {offsets = [9, 0], sizes = [1, 32], strides = [1, 1]} : vector<32x256xf32> to vector<1x32xf32>
    %11 = vector.extract_strided_slice %0 {offsets = [10, 0], sizes = [1, 32], strides = [1, 1]} : vector<32x256xf32> to vector<1x32xf32>
    %12 = vector.extract_strided_slice %0 {offsets = [11, 0], sizes = [1, 32], strides = [1, 1]} : vector<32x256xf32> to vector<1x32xf32>
    %13 = vector.extract_strided_slice %0 {offsets = [12, 0], sizes = [1, 64], strides = [1, 1]} : vector<32x256xf32> to vector<1x64xf32>
    %14 = vector.extract_strided_slice %0 {offsets = [13, 0], sizes = [1, 32], strides = [1, 1]} : vector<32x256xf32> to vector<1x32xf32>
    %15 = vector.extract_strided_slice %0 {offsets = [16, 0], sizes = [16, 16], strides = [1, 1]} : vector<32x256xf32> to vector<16x16xf32>
    %16 = vector.extract_strided_slice %0 {offsets = [16, 128], sizes = [16, 32], strides = [1, 1]} : vector<32x256xf32> to vector<16x32xf32>
    %c0_1 = arith.constant 0 : index
    %c0_2 = arith.constant 0 : index
    %17 = vector.load %arg3[%c0_1, %c0_2] : memref<32x320xbf16, #tpu.memory_space<vmem>>, vector<32x320xbf16>
    %18 = vector.extract_strided_slice %17 {offsets = [0, 0], sizes = [32, 192], strides = [1, 1]} : vector<32x320xbf16> to vector<32x192xbf16>
    %19 = vector.extract_strided_slice %17 {offsets = [0, 192], sizes = [32, 64], strides = [1, 1]} : vector<32x320xbf16> to vector<32x64xbf16>
    %20 = vector.extract_strided_slice %17 {offsets = [0, 256], sizes = [32, 64], strides = [1, 1]} : vector<32x320xbf16> to vector<32x64xbf16>
    %c0_3 = arith.constant 0 : index
    %c0_4 = arith.constant 0 : index
    %21 = vector.load %arg4[%c0_3, %c0_4] : memref<64x64xbf16, #tpu.memory_space<vmem>>, vector<64x64xbf16>
    %22 = vector.extract_strided_slice %21 {offsets = [0, 0], sizes = [64, 32], strides = [1, 1]} : vector<64x64xbf16> to vector<64x32xbf16>
    %23 = vector.extract_strided_slice %21 {offsets = [0, 32], sizes = [64, 32], strides = [1, 1]} : vector<64x64xbf16> to vector<64x32xbf16>
    %c0_5 = arith.constant 0 : index
    %c0_6 = arith.constant 0 : index
    %24 = vector.load %arg1[%c0_5, %c0_6] : memref<16x32xf32, #tpu.memory_space<vmem>>, vector<16x32xf32>
    %cst = arith.constant dense<0.000000e+00> : vector<16xf32>
    %25 = vector.multi_reduction <add>, %24, %cst [1] : vector<16x32xf32> to vector<16xf32>
    %26 = vector.shape_cast %25 : vector<16xf32> to vector<16x1xf32>
    %cst_7 = arith.constant 3.200000e+01 : f32
    %27 = vector.broadcast %cst_7 : f32 to vector<16x1xf32>
    %28 = arith.divf %26, %27 : vector<16x1xf32>
    %29 = vector.broadcast %28 : vector<16x1xf32> to vector<16x32xf32>
    %30 = arith.subf %24, %29 : vector<16x32xf32>
    %31 = arith.mulf %30, %30 : vector<16x32xf32>
    %cst_8 = arith.constant dense<0.000000e+00> : vector<16xf32>
    %32 = vector.multi_reduction <add>, %31, %cst_8 [1] : vector<16x32xf32> to vector<16xf32>
    %33 = vector.shape_cast %32 : vector<16xf32> to vector<16x1xf32>
    %cst_9 = arith.constant 3.200000e+01 : f32
    %34 = vector.broadcast %cst_9 : f32 to vector<16x1xf32>
    %35 = arith.divf %33, %34 : vector<16x1xf32>
    %cst_10 = arith.constant 9.99999974E-6 : f32
    %36 = vector.broadcast %cst_10 : f32 to vector<16x1xf32>
    %37 = arith.addf %35, %36 : vector<16x1xf32>
    %38 = math.rsqrt %37 : vector<16x1xf32>
    %39 = vector.broadcast %38 : vector<16x1xf32> to vector<16x32xf32>
    %40 = arith.mulf %30, %39 : vector<16x32xf32>
    %41 = vector.broadcast %1 : vector<1x32xf32> to vector<16x32xf32>
    %42 = arith.mulf %40, %41 : vector<16x32xf32>
    %43 = vector.broadcast %2 : vector<1x32xf32> to vector<16x32xf32>
    %44 = arith.addf %42, %43 : vector<16x32xf32>
    %45 = arith.truncf %44 : vector<16x32xf32> to vector<16x32xbf16>
    %cst_11 = arith.constant dense<0.000000e+00> : vector<16x64xf32>
    %46 = tpu.matmul %45, %20, %cst_11 {dimension_numbers = #tpu.dot_dimension_numbers<[1], [0], [0], [1], [0, 0, 1, 1], [], []>} : vector<16x32xbf16>, vector<32x64xbf16>, vector<16x64xf32> -> vector<16x64xf32>
    %47 = vector.broadcast %4 : vector<1x64xf32> to vector<16x64xf32>
    %48 = arith.addf %46, %47 : vector<16x64xf32>
    %49 = arith.negf %48 : vector<16x64xf32>
    %50 = math.exp %49 : vector<16x64xf32>
    %cst_12 = arith.constant 1.000000e+00 : f32
    %51 = vector.broadcast %cst_12 : f32 to vector<16x64xf32>
    %52 = arith.addf %51, %50 : vector<16x64xf32>
    %53 = arith.divf %51, %52 : vector<16x64xf32>
    %54 = arith.mulf %48, %53 : vector<16x64xf32>
    %55 = arith.mulf %44, %16 : vector<16x32xf32>
    %56 = vector.shape_cast %55 : vector<16x32xf32> to vector<2x8x32xf32>
    %c0_13 = arith.constant 0 : index
    %c0_14 = arith.constant 0 : index
    %c0_15 = arith.constant 0 : index
    %57 = vector.load %arg5[%c0_13, %c0_14, %c0_15] : memref<8x8x32xf32, #tpu.memory_space<vmem>>, vector<8x8x32xf32>
    %58 = vector.extract_strided_slice %56 {offsets = [0, 0, 0], sizes = [2, 1, 32], strides = [1, 1, 1]} : vector<2x8x32xf32> to vector<2x1x32xf32>
    %59 = vector.extract_strided_slice %57 {offsets = [0, 0, 0], sizes = [1, 8, 32], strides = [1, 1, 1]} : vector<8x8x32xf32> to vector<1x8x32xf32>
    %60 = vector.shape_cast %59 : vector<1x8x32xf32> to vector<8x32xf32>
    %61 = vector.shape_cast %60 : vector<8x32xf32> to vector<1x8x32xf32>
    %62 = vector.broadcast %58 : vector<2x1x32xf32> to vector<2x8x32xf32>
    %63 = vector.broadcast %61 : vector<1x8x32xf32> to vector<2x8x32xf32>
    %64 = arith.mulf %62, %63 : vector<2x8x32xf32>
    %65 = vector.extract_strided_slice %56 {offsets = [0, 1, 0], sizes = [2, 1, 32], strides = [1, 1, 1]} : vector<2x8x32xf32> to vector<2x1x32xf32>
    %66 = vector.extract_strided_slice %57 {offsets = [1, 0, 0], sizes = [1, 8, 32], strides = [1, 1, 1]} : vector<8x8x32xf32> to vector<1x8x32xf32>
    %67 = vector.shape_cast %66 : vector<1x8x32xf32> to vector<8x32xf32>
    %68 = vector.shape_cast %67 : vector<8x32xf32> to vector<1x8x32xf32>
    %69 = vector.broadcast %65 : vector<2x1x32xf32> to vector<2x8x32xf32>
    %70 = vector.broadcast %68 : vector<1x8x32xf32> to vector<2x8x32xf32>
    %71 = arith.mulf %69, %70 : vector<2x8x32xf32>
    %72 = arith.addf %64, %71 : vector<2x8x32xf32>
    %73 = vector.extract_strided_slice %56 {offsets = [0, 2, 0], sizes = [2, 1, 32], strides = [1, 1, 1]} : vector<2x8x32xf32> to vector<2x1x32xf32>
    %74 = vector.extract_strided_slice %57 {offsets = [2, 0, 0], sizes = [1, 8, 32], strides = [1, 1, 1]} : vector<8x8x32xf32> to vector<1x8x32xf32>
    %75 = vector.shape_cast %74 : vector<1x8x32xf32> to vector<8x32xf32>
    %76 = vector.shape_cast %75 : vector<8x32xf32> to vector<1x8x32xf32>
    %77 = vector.broadcast %73 : vector<2x1x32xf32> to vector<2x8x32xf32>
    %78 = vector.broadcast %76 : vector<1x8x32xf32> to vector<2x8x32xf32>
    %79 = arith.mulf %77, %78 : vector<2x8x32xf32>
    %80 = arith.addf %72, %79 : vector<2x8x32xf32>
    %81 = vector.extract_strided_slice %56 {offsets = [0, 3, 0], sizes = [2, 1, 32], strides = [1, 1, 1]} : vector<2x8x32xf32> to vector<2x1x32xf32>
    %82 = vector.extract_strided_slice %57 {offsets = [3, 0, 0], sizes = [1, 8, 32], strides = [1, 1, 1]} : vector<8x8x32xf32> to vector<1x8x32xf32>
    %83 = vector.shape_cast %82 : vector<1x8x32xf32> to vector<8x32xf32>
    %84 = vector.shape_cast %83 : vector<8x32xf32> to vector<1x8x32xf32>
    %85 = vector.broadcast %81 : vector<2x1x32xf32> to vector<2x8x32xf32>
    %86 = vector.broadcast %84 : vector<1x8x32xf32> to vector<2x8x32xf32>
    %87 = arith.mulf %85, %86 : vector<2x8x32xf32>
    %88 = arith.addf %80, %87 : vector<2x8x32xf32>
    %89 = vector.extract_strided_slice %56 {offsets = [0, 4, 0], sizes = [2, 1, 32], strides = [1, 1, 1]} : vector<2x8x32xf32> to vector<2x1x32xf32>
    %90 = vector.extract_strided_slice %57 {offsets = [4, 0, 0], sizes = [1, 8, 32], strides = [1, 1, 1]} : vector<8x8x32xf32> to vector<1x8x32xf32>
    %91 = vector.shape_cast %90 : vector<1x8x32xf32> to vector<8x32xf32>
    %92 = vector.shape_cast %91 : vector<8x32xf32> to vector<1x8x32xf32>
    %93 = vector.broadcast %89 : vector<2x1x32xf32> to vector<2x8x32xf32>
    %94 = vector.broadcast %92 : vector<1x8x32xf32> to vector<2x8x32xf32>
    %95 = arith.mulf %93, %94 : vector<2x8x32xf32>
    %96 = arith.addf %88, %95 : vector<2x8x32xf32>
    %97 = vector.extract_strided_slice %56 {offsets = [0, 5, 0], sizes = [2, 1, 32], strides = [1, 1, 1]} : vector<2x8x32xf32> to vector<2x1x32xf32>
    %98 = vector.extract_strided_slice %57 {offsets = [5, 0, 0], sizes = [1, 8, 32], strides = [1, 1, 1]} : vector<8x8x32xf32> to vector<1x8x32xf32>
    %99 = vector.shape_cast %98 : vector<1x8x32xf32> to vector<8x32xf32>
    %100 = vector.shape_cast %99 : vector<8x32xf32> to vector<1x8x32xf32>
    %101 = vector.broadcast %97 : vector<2x1x32xf32> to vector<2x8x32xf32>
    %102 = vector.broadcast %100 : vector<1x8x32xf32> to vector<2x8x32xf32>
    %103 = arith.mulf %101, %102 : vector<2x8x32xf32>
    %104 = arith.addf %96, %103 : vector<2x8x32xf32>
    %105 = vector.extract_strided_slice %56 {offsets = [0, 6, 0], sizes = [2, 1, 32], strides = [1, 1, 1]} : vector<2x8x32xf32> to vector<2x1x32xf32>
    %106 = vector.extract_strided_slice %57 {offsets = [6, 0, 0], sizes = [1, 8, 32], strides = [1, 1, 1]} : vector<8x8x32xf32> to vector<1x8x32xf32>
    %107 = vector.shape_cast %106 : vector<1x8x32xf32> to vector<8x32xf32>
    %108 = vector.shape_cast %107 : vector<8x32xf32> to vector<1x8x32xf32>
    %109 = vector.broadcast %105 : vector<2x1x32xf32> to vector<2x8x32xf32>
    %110 = vector.broadcast %108 : vector<1x8x32xf32> to vector<2x8x32xf32>
    %111 = arith.mulf %109, %110 : vector<2x8x32xf32>
    %112 = arith.addf %104, %111 : vector<2x8x32xf32>
    %113 = vector.extract_strided_slice %56 {offsets = [0, 7, 0], sizes = [2, 1, 32], strides = [1, 1, 1]} : vector<2x8x32xf32> to vector<2x1x32xf32>
    %114 = vector.extract_strided_slice %57 {offsets = [7, 0, 0], sizes = [1, 8, 32], strides = [1, 1, 1]} : vector<8x8x32xf32> to vector<1x8x32xf32>
    %115 = vector.shape_cast %114 : vector<1x8x32xf32> to vector<8x32xf32>
    %116 = vector.shape_cast %115 : vector<8x32xf32> to vector<1x8x32xf32>
    %117 = vector.broadcast %113 : vector<2x1x32xf32> to vector<2x8x32xf32>
    %118 = vector.broadcast %116 : vector<1x8x32xf32> to vector<2x8x32xf32>
    %119 = arith.mulf %117, %118 : vector<2x8x32xf32>
    %120 = arith.addf %112, %119 : vector<2x8x32xf32>
    %121 = vector.shape_cast %120 : vector<2x8x32xf32> to vector<16x32xf32>
    %122 = vector.broadcast %3 : vector<1x32xf32> to vector<16x32xf32>
    %123 = arith.mulf %44, %122 : vector<16x32xf32>
    %124 = arith.addf %121, %123 : vector<16x32xf32>
    %125 = arith.negf %124 : vector<16x32xf32>
    %126 = math.exp %125 : vector<16x32xf32>
    %cst_16 = arith.constant 1.000000e+00 : f32
    %127 = vector.broadcast %cst_16 : f32 to vector<16x32xf32>
    %128 = arith.addf %127, %126 : vector<16x32xf32>
    %129 = arith.divf %127, %128 : vector<16x32xf32>
    %130 = arith.mulf %124, %129 : vector<16x32xf32>
    %131 = arith.truncf %130 : vector<16x32xf32> to vector<16x32xbf16>
    %cst_17 = arith.constant dense<0.000000e+00> : vector<16x192xf32>
    %132 = tpu.matmul %131, %18, %cst_17 {dimension_numbers = #tpu.dot_dimension_numbers<[1], [0], [0], [1], [0, 0, 1, 1], [], []>} : vector<16x32xbf16>, vector<32x192xbf16>, vector<16x192xf32> -> vector<16x192xf32>
    %133 = vector.broadcast %5 : vector<1x192xf32> to vector<16x192xf32>
    %134 = arith.addf %132, %133 : vector<16x192xf32>
    %135 = vector.extract_strided_slice %134 {offsets = [0, 0], sizes = [16, 32], strides = [1, 1]} : vector<16x192xf32> to vector<16x32xf32>
    %136 = arith.negf %135 : vector<16x32xf32>
    %137 = math.exp %136 : vector<16x32xf32>
    %cst_18 = arith.constant 1.000000e+00 : f32
    %138 = vector.broadcast %cst_18 : f32 to vector<16x32xf32>
    %139 = arith.addf %138, %137 : vector<16x32xf32>
    %140 = arith.divf %138, %139 : vector<16x32xf32>
    %141 = vector.extract_strided_slice %134 {offsets = [0, 32], sizes = [16, 16], strides = [1, 1]} : vector<16x192xf32> to vector<16x16xf32>
    %142 = arith.negf %141 : vector<16x16xf32>
    %143 = math.exp %142 : vector<16x16xf32>
    %cst_19 = arith.constant 1.000000e+00 : f32
    %144 = vector.broadcast %cst_19 : f32 to vector<16x16xf32>
    %145 = arith.addf %144, %143 : vector<16x16xf32>
    %146 = arith.divf %144, %145 : vector<16x16xf32>
    %147 = arith.mulf %141, %146 : vector<16x16xf32>
    %148 = vector.extract_strided_slice %134 {offsets = [0, 48], sizes = [16, 32], strides = [1, 1]} : vector<16x192xf32> to vector<16x32xf32>
    %149 = vector.extract_strided_slice %134 {offsets = [0, 128], sizes = [16, 64], strides = [1, 1]} : vector<16x192xf32> to vector<16x64xf32>
    %150 = arith.negf %149 : vector<16x64xf32>
    %151 = math.exp %150 : vector<16x64xf32>
    %cst_20 = arith.constant 1.000000e+00 : f32
    %152 = vector.broadcast %cst_20 : f32 to vector<16x64xf32>
    %153 = arith.addf %152, %151 : vector<16x64xf32>
    %154 = arith.divf %152, %153 : vector<16x64xf32>
    %155 = arith.mulf %149, %154 : vector<16x64xf32>
    %156 = vector.broadcast %6 : vector<1x16xf32> to vector<16x16xf32>
    %157 = arith.mulf %147, %156 : vector<16x16xf32>
    %158 = vector.broadcast %8 : vector<1x16xf32> to vector<16x16xf32>
    %159 = arith.addf %157, %158 : vector<16x16xf32>
    %160 = vector.broadcast %7 : vector<1x16xf32> to vector<16x16xf32>
    %161 = arith.mulf %147, %160 : vector<16x16xf32>
    %162 = vector.broadcast %9 : vector<1x16xf32> to vector<16x16xf32>
    %163 = arith.addf %161, %162 : vector<16x16xf32>
    %164 = arith.truncf %159 : vector<16x16xf32> to vector<16x16xbf16>
    %165 = arith.truncf %163 : vector<16x16xf32> to vector<16x16xbf16>
    %166 = tpu.transpose %165, [1, 0] : vector<16x16xbf16> -> vector<16x16xbf16>
    %cst_21 = arith.constant dense<0.000000e+00> : vector<16x16xf32>
    %167 = tpu.matmul %164, %166, %cst_21 {dimension_numbers = #tpu.dot_dimension_numbers<[1], [0], [0], [1], [0, 0, 1, 1], [], []>} : vector<16x16xbf16>, vector<16x16xbf16>, vector<16x16xf32> -> vector<16x16xf32>
    %168 = arith.addf %167, %15 : vector<16x16xf32>
    %cst_22 = arith.constant dense<0xFF800000> : vector<16xf32>
    %169 = vector.multi_reduction <maximumf>, %168, %cst_22 [1] : vector<16x16xf32> to vector<16xf32>
    %170 = vector.shape_cast %169 : vector<16xf32> to vector<16x1xf32>
    %171 = vector.broadcast %170 : vector<16x1xf32> to vector<16x16xf32>
    %172 = arith.subf %168, %171 : vector<16x16xf32>
    %173 = math.exp %172 : vector<16x16xf32>
    %cst_23 = arith.constant dense<0.000000e+00> : vector<16xf32>
    %174 = vector.multi_reduction <add>, %173, %cst_23 [1] : vector<16x16xf32> to vector<16xf32>
    %175 = vector.shape_cast %174 : vector<16xf32> to vector<16x1xf32>
    %176 = tpu.reciprocal %175 {approx = true} : vector<16x1xf32> -> vector<16x1xf32>
    %177 = vector.broadcast %176 : vector<16x1xf32> to vector<16x16xf32>
    %178 = arith.mulf %173, %177 : vector<16x16xf32>
    %179 = arith.truncf %178 : vector<16x16xf32> to vector<16x16xbf16>
    %180 = arith.truncf %54 : vector<16x64xf32> to vector<16x64xbf16>
    %cst_24 = arith.constant dense<0.000000e+00> : vector<16x64xf32>
    %181 = tpu.matmul %179, %180, %cst_24 {dimension_numbers = #tpu.dot_dimension_numbers<[1], [0], [0], [1], [0, 0, 1, 1], [], []>} : vector<16x16xbf16>, vector<16x64xbf16>, vector<16x64xf32> -> vector<16x64xf32>
    %182 = arith.mulf %181, %155 : vector<16x64xf32>
    %183 = arith.truncf %182 : vector<16x64xf32> to vector<16x64xbf16>
    %cst_25 = arith.constant dense<0.000000e+00> : vector<16x32xf32>
    %184 = tpu.matmul %183, %22, %cst_25 {dimension_numbers = #tpu.dot_dimension_numbers<[1], [0], [0], [1], [0, 0, 1, 1], [], []>} : vector<16x64xbf16>, vector<64x32xbf16>, vector<16x32xf32> -> vector<16x32xf32>
    %185 = arith.addf %148, %184 : vector<16x32xf32>
    %186 = vector.broadcast %10 : vector<1x32xf32> to vector<16x32xf32>
    %187 = arith.addf %185, %186 : vector<16x32xf32>
    %188 = arith.negf %187 : vector<16x32xf32>
    %189 = math.exp %188 : vector<16x32xf32>
    %cst_26 = arith.constant 1.000000e+00 : f32
    %190 = vector.broadcast %cst_26 : f32 to vector<16x32xf32>
    %191 = arith.addf %190, %189 : vector<16x32xf32>
    %192 = arith.divf %190, %191 : vector<16x32xf32>
    %193 = arith.mulf %187, %192 : vector<16x32xf32>
    %194 = arith.subf %193, %24 : vector<16x32xf32>
    %195 = arith.mulf %140, %194 : vector<16x32xf32>
    %196 = arith.addf %24, %195 : vector<16x32xf32>
    %cst_27 = arith.constant dense<0.000000e+00> : vector<16xf32>
    %197 = vector.multi_reduction <add>, %196, %cst_27 [1] : vector<16x32xf32> to vector<16xf32>
    %198 = vector.shape_cast %197 : vector<16xf32> to vector<16x1xf32>
    %cst_28 = arith.constant 3.200000e+01 : f32
    %199 = vector.broadcast %cst_28 : f32 to vector<16x1xf32>
    %200 = arith.divf %198, %199 : vector<16x1xf32>
    %201 = vector.broadcast %200 : vector<16x1xf32> to vector<16x32xf32>
    %202 = arith.subf %196, %201 : vector<16x32xf32>
    %203 = arith.mulf %202, %202 : vector<16x32xf32>
    %cst_29 = arith.constant dense<0.000000e+00> : vector<16xf32>
    %204 = vector.multi_reduction <add>, %203, %cst_29 [1] : vector<16x32xf32> to vector<16xf32>
    %205 = vector.shape_cast %204 : vector<16xf32> to vector<16x1xf32>
    %cst_30 = arith.constant 3.200000e+01 : f32
    %206 = vector.broadcast %cst_30 : f32 to vector<16x1xf32>
    %207 = arith.divf %205, %206 : vector<16x1xf32>
    %cst_31 = arith.constant 9.99999974E-6 : f32
    %208 = vector.broadcast %cst_31 : f32 to vector<16x1xf32>
    %209 = arith.addf %207, %208 : vector<16x1xf32>
    %210 = math.rsqrt %209 : vector<16x1xf32>
    %211 = vector.broadcast %210 : vector<16x1xf32> to vector<16x32xf32>
    %212 = arith.mulf %202, %211 : vector<16x32xf32>
    %213 = vector.broadcast %11 : vector<1x32xf32> to vector<16x32xf32>
    %214 = arith.mulf %212, %213 : vector<16x32xf32>
    %215 = vector.broadcast %12 : vector<1x32xf32> to vector<16x32xf32>
    %216 = arith.addf %214, %215 : vector<16x32xf32>
    %217 = arith.truncf %216 : vector<16x32xf32> to vector<16x32xbf16>
    %cst_32 = arith.constant dense<0.000000e+00> : vector<16x64xf32>
    %218 = tpu.matmul %217, %19, %cst_32 {dimension_numbers = #tpu.dot_dimension_numbers<[1], [0], [0], [1], [0, 0, 1, 1], [], []>} : vector<16x32xbf16>, vector<32x64xbf16>, vector<16x64xf32> -> vector<16x64xf32>
    %219 = vector.broadcast %13 : vector<1x64xf32> to vector<16x64xf32>
    %220 = arith.addf %218, %219 : vector<16x64xf32>
    %221 = arith.negf %220 : vector<16x64xf32>
    %222 = math.exp %221 : vector<16x64xf32>
    %cst_33 = arith.constant 1.000000e+00 : f32
    %223 = vector.broadcast %cst_33 : f32 to vector<16x64xf32>
    %224 = arith.addf %223, %222 : vector<16x64xf32>
    %225 = arith.divf %223, %224 : vector<16x64xf32>
    %226 = arith.mulf %220, %225 : vector<16x64xf32>
    %227 = arith.truncf %226 : vector<16x64xf32> to vector<16x64xbf16>
    %cst_34 = arith.constant dense<0.000000e+00> : vector<16x32xf32>
    %228 = tpu.matmul %227, %23, %cst_34 {dimension_numbers = #tpu.dot_dimension_numbers<[1], [0], [0], [1], [0, 0, 1, 1], [], []>} : vector<16x64xbf16>, vector<64x32xbf16>, vector<16x32xf32> -> vector<16x32xf32>
    %229 = vector.broadcast %14 : vector<1x32xf32> to vector<16x32xf32>
    %230 = arith.addf %228, %229 : vector<16x32xf32>
    %231 = arith.addf %230, %196 : vector<16x32xf32>
    %c0_35 = arith.constant 0 : index
    %c0_36 = arith.constant 0 : index
    %232 = vector.load %arg6[%c0_35, %c0_36] : memref<16x32xf32, #tpu.memory_space<vmem>>, vector<16x32xf32>
    tpu.vector_store %arg6[%c0_35, %c0_36], %231 {strides = array<i32>} : memref<16x32xf32, #tpu.memory_space<vmem>>, vector<16x32xf32>,
    return
  }
  func.func @transform_0(%arg0: i32) -> (i32, i32) {
    %c0_i32 = arith.constant 0 : i32
    %c0_i32_0 = arith.constant 0 : i32
    %c0_i32_1 = arith.constant 0 : i32
    return %c0_i32, %c0_i32_0 : i32, i32
  }
  func.func @transform_1(%arg0: i32) -> (i32, i32) {
    %c0_i32 = arith.constant 0 : i32
    %c0_i32_0 = arith.constant 0 : i32
    %c0_i32_1 = arith.constant 0 : i32
    return %c0_i32, %c0_i32_0 : i32, i32
  }
  func.func @transform_2(%arg0: i32) -> (i32, i32) {
    %c0_i32 = arith.constant 0 : i32
    %c0_i32_0 = arith.constant 0 : i32
    %c0_i32_1 = arith.constant 0 : i32
    return %c0_i32, %c0_i32_0 : i32, i32
  }
  func.func @transform_3(%arg0: i32) -> (i32, i32) {
    %c0_i32 = arith.constant 0 : i32
    %c0_i32_0 = arith.constant 0 : i32
    %c0_i32_1 = arith.constant 0 : i32
    return %c0_i32, %c0_i32_0 : i32, i32
  }
  func.func @transform_4(%arg0: i32) -> (i32, i32, i32) {
    %c0_i32 = arith.constant 0 : i32
    %c0_i32_0 = arith.constant 0 : i32
    %c0_i32_1 = arith.constant 0 : i32
    %c0_i32_2 = arith.constant 0 : i32
    return %c0_i32, %c0_i32_0, %c0_i32_1 : i32, i32, i32
  }
  func.func @transform_5(%arg0: i32) -> (i32, i32) {
    %c0_i32 = arith.constant 0 : i32
    %c0_i32_0 = arith.constant 0 : i32
    %c0_i32_1 = arith.constant 0 : i32
    return %c0_i32, %c0_i32_0 : i32, i32
  }
}

</mosaic_0001>

<llo_original>
// kernel: tpu_custom_call.1
$region0: #{tpu_custom_call.1}
  #allocation0 [shape = 'u32[]', space=smem, size = 0x4, offset = 0x4, fixed_abs, tag = 'smem constant byte address 0x4 - core index']
  #allocation1 [shape = 'u32[144,128]{1,0:T(1,128)}', space=vmem, size = 0x12000, scoped, tag = 'internal scratch']
  %s0 = inlined_call_operand.hbm [shape: f32[16,32], index: 0, kind: input, shape index: {}]
  %s1 = inlined_call_operand.hbm [shape: f32[32,256], index: 1, kind: input, shape index: {}]
  %s2 = inlined_call_operand.hbm [shape: bf16[32,320], index: 2, kind: input, shape index: {}]
  %s3 = inlined_call_operand.hbm [shape: bf16[64,64], index: 3, kind: input, shape index: {}]
  %s4 = inlined_call_operand.hbm [shape: f32[8,8,32], index: 4, kind: input, shape index: {}]
  %s5 = inlined_call_operand.hbm [shape: f32[16,32], index: 5, kind: output, shape index: {}]
  %s6 = sld [smem:[#allocation0]]
  $region50: #{tpu_custom_call.1} parent=0
    _
  %s8 = ssub.s32 1, %s6
  %s9 = scalar_select 0, %s8, %s6
  $region1: #{tpu_custom_call.1} parent=0
    #allocation2 [shape = 'u8[8192]{0}', space=vmem, size = 0x2000, scoped, tag = 'input window, operand 0, single buffered']
    #allocation3 [shape = 's32[1]{0}', space=sflag, size = 0x4, scoped, tag = 'scoped memory for tpu_custom_call.1']
    #allocation4 [shape = 's32[1]{0}', space=sflag, size = 0x4, scoped, tag = 'scoped memory for tpu_custom_call.1']
    #allocation5 [shape = 'u8[32768]{0}', space=vmem, size = 0x8000, scoped, tag = 'input window, operand 1, single buffered']
    #allocation6 [shape = 's32[1]{0}', space=sflag, size = 0x4, scoped, tag = 'scoped memory for tpu_custom_call.1']
    #allocation7 [shape = 'u8[24576]{0}', space=vmem, size = 0x6000, scoped, tag = 'input window, operand 2, single buffered']
    #allocation8 [shape = 'u8[16384]{0}', space=vmem, size = 0x4000, scoped, tag = 'input window, operand 3, single buffered']
    #allocation9 [shape = 's32[1]{0}', space=sflag, size = 0x4, scoped, tag = 'scoped memory for tpu_custom_call.1']
    #allocation10 [shape = 'u8[32768]{0}', space=vmem, size = 0x8000, scoped, tag = 'input window, operand 4, single buffered']
    #allocation11 [shape = 'u8[8192]{0}', space=vmem, size = 0x2000, scoped, tag = 'output window, operand 0, single buffered']
    %10 = vsyncpa [#allocation3], 0
    %11 = vsyncpa [#allocation6], 0
    %12 = vsyncpa [#allocation9], 0
    %13 = vsyncpa [#allocation4], 0
    // Predicated region
    $region2: #{tpu_custom_call.1} parent=1 // pred_check
      _
    $region3: #{tpu_custom_call.1} parent=1 // pred_check_branch
      %15 = sbr.rel (0) target = $region5
    $region4: #{tpu_custom_call.1} parent=1 // pred_region
      %s17 = ssub.s32 256, 256
      %18 = vsyncadd [#allocation3], %s17
      %s19 = sshll.u32 [#allocation2], 4
      %s20 = int_to_ptr.vmem [resolvable:$true] %s19
      %25 = dma.hbm_to_vmem [thread:$0]  %s0, 256, %s20, [#allocation3], 128, 128, 8
    $region5: #{tpu_custom_call.1} parent=1 // pred_fallthru
      _
    // Predicated region
    $region6: #{tpu_custom_call.1} parent=1 // pred_check
      _
    $region7: #{tpu_custom_call.1} parent=1 // pred_check_branch
      %27 = sbr.rel (0) target = $region9
    $region8: #{tpu_custom_call.1} parent=1 // pred_region
      %s29 = ssub.s32 1024, 1024
      %30 = vsyncadd [#allocation6], %s29
      %s31 = sshll.u32 [#allocation5], 4
      %s32 = int_to_ptr.vmem [resolvable:$true] %s31
      %37 = dma.hbm_to_vmem [thread:$0]  %s1, 1024, %s32, [#allocation6], 256, 256, 16
    $region9: #{tpu_custom_call.1} parent=1 // pred_fallthru
      _
    // Predicated region
    $region10: #{tpu_custom_call.1} parent=1 // pred_check
      _
    $region11: #{tpu_custom_call.1} parent=1 // pred_check_branch
      %39 = sbr.rel (0) target = $region13
    $region12: #{tpu_custom_call.1} parent=1 // pred_region
      %s41 = ssub.s32 768, 768
      %42 = vsyncadd [#allocation6], %s41
      %s43 = sshll.u32 [#allocation7], 4
      %s44 = int_to_ptr.vmem [resolvable:$true] %s43
      %49 = dma.hbm_to_vmem [thread:$0]  %s2, 768, %s44, [#allocation6], 192, 192, 12
    $region13: #{tpu_custom_call.1} parent=1 // pred_fallthru
      _
    // Predicated region
    $region14: #{tpu_custom_call.1} parent=1 // pred_check
      _
    $region15: #{tpu_custom_call.1} parent=1 // pred_check_branch
      %51 = sbr.rel (0) target = $region17
    $region16: #{tpu_custom_call.1} parent=1 // pred_region
      %s53 = ssub.s32 512, 512
      %54 = vsyncadd [#allocation9], %s53
      %s55 = sshll.u32 [#allocation8], 4
      %s56 = int_to_ptr.vmem [resolvable:$true] %s55
      %61 = dma.hbm_to_vmem [thread:$0]  %s3, 512, %s56, [#allocation9], 64, 64, 4
    $region17: #{tpu_custom_call.1} parent=1 // pred_fallthru
      _
    // Predicated region
    $region18: #{tpu_custom_call.1} parent=1 // pred_check
      _
    $region19: #{tpu_custom_call.1} parent=1 // pred_check_branch
      %63 = sbr.rel (0) target = $region21
    $region20: #{tpu_custom_call.1} parent=1 // pred_region
      %s65 = ssub.s32 1024, 1024
      %66 = vsyncadd [#allocation9], %s65
      %s67 = sshll.u32 [#allocation10], 4
      %s68 = int_to_ptr.vmem [resolvable:$true] %s67
      %73 = dma.hbm_to_vmem [thread:$0]  %s4, 1024, %s68, [#allocation9], 128, 128, 8
    $region21: #{tpu_custom_call.1} parent=1 // pred_fallthru
      _
    // Predicated region
    $region22: #{tpu_custom_call.1} parent=1 // pred_check
      _
    $region23: #{tpu_custom_call.1} parent=1 // pred_check_branch
      %75 = sbr.rel (0) target = $region25
    $region24: #{tpu_custom_call.1} parent=1 // pred_region
      %76 = dma.done [#allocation3], 256
    $region25: #{tpu_custom_call.1} parent=1 // pred_fallthru
      _
    // Predicated region
    $region26: #{tpu_custom_call.1} parent=1 // pred_check
      _
    $region27: #{tpu_custom_call.1} parent=1 // pred_check_branch
      %78 = sbr.rel (0) target = $region29
    $region28: #{tpu_custom_call.1} parent=1 // pred_region
      %79 = dma.done [#allocation6], 1024
    $region29: #{tpu_custom_call.1} parent=1 // pred_fallthru
      _
    // Predicated region
    $region30: #{tpu_custom_call.1} parent=1 // pred_check
      _
    $region31: #{tpu_custom_call.1} parent=1 // pred_check_branch
      %81 = sbr.rel (0) target = $region33
    $region32: #{tpu_custom_call.1} parent=1 // pred_region
      %82 = dma.done [#allocation6], 768
    $region33: #{tpu_custom_call.1} parent=1 // pred_fallthru
      _
    // Predicated region
    $region34: #{tpu_custom_call.1} parent=1 // pred_check
      _
    $region35: #{tpu_custom_call.1} parent=1 // pred_check_branch
      %84 = sbr.rel (0) target = $region37
    $region36: #{tpu_custom_call.1} parent=1 // pred_region
      %85 = dma.done [#allocation9], 512
    $region37: #{tpu_custom_call.1} parent=1 // pred_fallthru
      _
    // Predicated region
    $region38: #{tpu_custom_call.1} parent=1 // pred_check
      _
    $region39: #{tpu_custom_call.1} parent=1 // pred_check_branch
      %87 = sbr.rel (0) target = $region41
    $region40: #{tpu_custom_call.1} parent=1 // pred_region
      %88 = dma.done [#allocation9], 1024
    $region41: #{tpu_custom_call.1} parent=1 // pred_fallthru
      _
    %v90 = vld [vmem:[#allocation5] sm:$0xff]
    %v91 = vld [vmem:[#allocation5 + $0x8] sm:$0xff]
    %v92 = vld [vmem:[#allocation5 + $0x10] sm:$0xff]
    %v93 = vld [vmem:[#allocation5 + $0x20] sm:$0xff]
    %v94 = vld [vmem:[#allocation5 + $0x28] sm:$0xff]
    %v95 = vld [vmem:[#allocation5 + $0x30] sm:$0xff]
    %v96 = vld [vmem:[#allocation5 + $0x38] sm:$0xff]
    %v97 = vld [vmem:[#allocation7] sm:$0xff]
    %v98 = vld [vmem:[#allocation7 + $0x8] sm:$0xf]
    %v99 = vld [vmem:[#allocation7 + $0xc] sm:$0xff]
    %v100 = vld [vmem:[#allocation7 + $0x14] sm:$0xf]
    %v101 = vld [vmem:[#allocation7 + $0x18] sm:$0xff]
    %v102 = vld [vmem:[#allocation7 + $0x20] sm:$0xf]
    %v103 = vld [vmem:[#allocation7 + $0x24] sm:$0xff]
    %v104 = vld [vmem:[#allocation7 + $0x2c] sm:$0xf]
    %v105 = vld [vmem:[#allocation8] sm:$0xf]
    %v106 = vld [vmem:[#allocation8 + $0x4] sm:$0xf]
    %v107 = vld [vmem:[#allocation8 + $0x8] sm:$0xf]
    %v108 = vld [vmem:[#allocation8 + $0xc] sm:$0xf]
    %v109 = vld [vmem:[#allocation8 + $0x10] sm:$0xf]
    %v110 = vld [vmem:[#allocation8 + $0x14] sm:$0xf]
    %v111 = vld [vmem:[#allocation8 + $0x18] sm:$0xf]
    %v112 = vld [vmem:[#allocation8 + $0x1c] sm:$0xf]
    %v113 = vld [vmem:[#allocation2] sm:$0xff]
    %v114 = vld [vmem:[#allocation2 + $0x8] sm:$0xff]
    %vm115 = vcmask 261120
    %v116 = vsel %vm115, %v113, 0.0
    %117 = vadd.xlane.f32.xlu0 %v116
    %v118 = vpop.xlane.xlu0 %117
    %v119 = vsel %vm115, %v114, 0.0
    %120 = vadd.xlane.f32.xlu0 %v119
    %v121 = vpop.xlane.xlu0 %120
    %v122 = vrcp.pop 32.0
    %v123 = vmul.f32 %v118, %v122
    %v124 = vmul.f32 %v121, %v122
    %v125 = vsub.f32 %v113, %v123
    %v126 = vsub.f32 %v114, %v124
    %v127 = vmul.f32 %v125, %v125
    %v128 = vmul.f32 %v126, %v126
    %v129 = vsel %vm115, %v127, 0.0
    %130 = vadd.xlane.f32.xlu0 %v129
    %v131 = vpop.xlane.xlu0 %130
    %v132 = vsel %vm115, %v128, 0.0
    %133 = vadd.xlane.f32.xlu0 %v132
    %v134 = vpop.xlane.xlu0 %133
    %v135 = vmul.f32 %v131, %v122
    %v136 = vmul.f32 %v134, %v122
    %v137 = vadd.f32 %v135, 1e-05
    %v138 = vadd.f32 %v136, 1e-05
    %v139 = vrsqrt.pop %v137
    %v140 = vrsqrt.pop %v138
    %v141 = vmul.f32 %v125, %v139
    %v142 = vmul.f32 %v126, %v140
    %v143 = vlaneseq
    %v144 = vshrl.u32 %v143, 7
    %v145 = vsub.s32 0, %v144
    %v146 = vrot.slane %v90, %v145
    %v147 = vmul.f32 %v141, %v146
    %v148 = vmul.f32 %v142, %v146
    %v149 = vlaneseq
    %v150 = vshrl.u32 %v149, 7
    %v151 = vsub.s32 1, %v150
    %v152 = vrot.slane %v90, %v151
    %v153 = vadd.f32 %v147, %v152
    %v154 = vadd.f32 %v148, %v152
    %v155 = vpack.c.bf16 %v154, %v153
    %v156 = vlaneseq
    %v157 = vshrl.u32 %v156, 7
    %v158 = vsub.s32 3, %v157
    %v159 = vrot.slane %v90, %v158
    %v164 = vunpack.c.l.b16 %v98
    %v165 = vunpack.c.l.b16 %v100
    %v166 = vunpack.c.l.b16 %v102
    %v167 = vunpack.c.l.b16 %v104
    %v168 = vpack.c.b16 %v165, %v164
    %v169 = vpack.c.b16 %v167, %v166
    %v173 = vsel %vm115, %v155, 0
    %175 = vmatprep.subr.bf16.mxu0 0
    %176 = vmatpush1.bf16.msra.mxu0 0
    %177 = vmatprep.subr.bf16.mxu0 0
    %178 = vmatpush1.bf16.msra.mxu0 0
    %179 = vmatprep.subr.bf16.mxu0 0
    %180 = vmatpush1.bf16.msra.mxu0 0
    %181 = vmatprep.subr.bf16.mxu0 0
    %182 = vmatpush1.bf16.msra.mxu0 0
    %183 = vmatprep.subr.bf16.mxu0 0
    %184 = vmatpush1.bf16.msra.mxu0 0
    %185 = vmatprep.subr.bf16.mxu0 0
    %186 = vmatpush1.bf16.msra.mxu0 0
    %187 = vmatprep.subr.bf16.mxu0 0
    %188 = vmatpush1.bf16.msra.mxu0 %v169
    %189 = vmatprep.subr.bf16.mxu0 0
    %190 = vmatpush1.bf16.msra.mxu0 %v168
    %191 = vmatprep.subr.bf16.mxu0 0
    %192 = vmatpush2.bf16.msra.mxu0 0
    %193 = vmatprep.subr.bf16.mxu0 0
    %194 = vmatpush2.bf16.msra.mxu0 0
    %195 = vmatprep.subr.bf16.mxu0 0
    %196 = vmatpush2.bf16.msra.mxu0 0
    %197 = vmatprep.subr.bf16.mxu0 0
    %198 = vmatpush2.bf16.msra.mxu0 0
    %199 = vmatprep.subr.bf16.mxu0 0
    %200 = vmatpush2.bf16.msra.mxu0 0
    %201 = vmatprep.subr.bf16.mxu0 0
    %202 = vmatpush2.bf16.msra.mxu0 0
    %203 = vmatprep.subr.bf16.mxu0 0
    %204 = vmatpush2.bf16.msra.mxu0 0
    %205 = vmatprep.subr.bf16.mxu0 0
    %206 = vmatpush2.bf16.msra.mxu0 0
    %207 = vmatprep.mubr.bf16.mxu0 0
    %208 = vmatmul.mubr.bf16.gmra.mxu0 %v173
    %v209 = vpop.f32.mrf.mxu0
    %v210 = vadd.f32 %v159, %v209
    %v211 = vpop.f32.mrf.mxu0
    %v212 = vpop.f32.mrf.mxu0
    %v213 = vadd.f32 %v159, %v212
    %v214 = vpop.f32.mrf.mxu0
    %215 = vdwg.mxu0
    %v216 = vxor.u32 %v210, 2147483648
    %v217 = vxor.u32 %v213, 2147483648
    %v218 = vmul.f32 %v216, 1.442695
    %v219 = vpow.pop %v218
    %v220 = vmul.f32 %v217, 1.442695
    %v221 = vpow.pop %v220
    %v222 = vadd.f32 %v219, 1.0
    %v223 = vadd.f32 %v221, 1.0
    %v224 = vrcp.pop %v222
    %v225 = vmul.f32 1.0, %v224
    %v226 = vrcp.pop %v223
    %v227 = vmul.f32 1.0, %v226
    %v228 = vmul.f32 %v210, %v225
    %v229 = vmul.f32 %v213, %v227
    %v230 = vmul.f32 %v153, %v94
    %v231 = vmul.f32 %v154, %v96
    %v232 = vld [vmem:[#allocation10] sm:$0xff]
    %v233 = vld [vmem:[#allocation10 + $0x8] sm:$0xff]
    %v234 = vld [vmem:[#allocation10 + $0x10] sm:$0xff]
    %v235 = vld [vmem:[#allocation10 + $0x18] sm:$0xff]
    %v236 = vld [vmem:[#allocation10 + $0x20] sm:$0xff]
    %v237 = vld [vmem:[#allocation10 + $0x28] sm:$0xff]
    %v238 = vld [vmem:[#allocation10 + $0x30] sm:$0xff]
    %v239 = vld [vmem:[#allocation10 + $0x38] sm:$0xff]
    %v240 = vlaneseq
    %v241 = vshrl.u32 %v240, 7
    %v242 = vsub.s32 0, %v241
    %v243 = vrot.slane %v230, %v242
    %v244 = vlaneseq
    %v245 = vshrl.u32 %v244, 7
    %v246 = vsub.s32 0, %v245
    %v247 = vrot.slane %v231, %v246
    %v248 = vmul.f32 %v243, %v232
    %v249 = vmul.f32 %v247, %v232
    %v250 = vlaneseq
    %v251 = vshrl.u32 %v250, 7
    %v252 = vsub.s32 1, %v251
    %v253 = vrot.slane %v230, %v252
    %v254 = vlaneseq
    %v255 = vshrl.u32 %v254, 7
    %v256 = vsub.s32 1, %v255
    %v257 = vrot.slane %v231, %v256
    %v258 = vmul.f32 %v253, %v233
    %v259 = vmul.f32 %v257, %v233
    %v260 = vadd.f32 %v248, %v258
    %v261 = vadd.f32 %v249, %v259
    %v262 = vlaneseq
    %v263 = vshrl.u32 %v262, 7
    %v264 = vsub.s32 2, %v263
    %v265 = vrot.slane %v230, %v264
    %v266 = vlaneseq
    %v267 = vshrl.u32 %v266, 7
    %v268 = vsub.s32 2, %v267
    %v269 = vrot.slane %v231, %v268
    %v270 = vmul.f32 %v265, %v234
    %v271 = vmul.f32 %v269, %v234
    %v272 = vadd.f32 %v260, %v270
    %v273 = vadd.f32 %v261, %v271
    %v274 = vlaneseq
    %v275 = vshrl.u32 %v274, 7
    %v276 = vsub.s32 3, %v275
    %v277 = vrot.slane %v230, %v276
    %v278 = vlaneseq
    %v279 = vshrl.u32 %v278, 7
    %v280 = vsub.s32 3, %v279
    %v281 = vrot.slane %v231, %v280
    %v282 = vmul.f32 %v277, %v235
    %v283 = vmul.f32 %v281, %v235
    %v284 = vadd.f32 %v272, %v282
    %v285 = vadd.f32 %v273, %v283
    %v286 = vlaneseq
    %v287 = vshrl.u32 %v286, 7
    %v288 = vsub.s32 4, %v287
    %v289 = vrot.slane %v230, %v288
    %v290 = vlaneseq
    %v291 = vshrl.u32 %v290, 7
    %v292 = vsub.s32 4, %v291
    %v293 = vrot.slane %v231, %v292
    %v294 = vmul.f32 %v289, %v236
    %v295 = vmul.f32 %v293, %v236
    %v296 = vadd.f32 %v284, %v294
    %v297 = vadd.f32 %v285, %v295
    %v298 = vlaneseq
    %v299 = vshrl.u32 %v298, 7
    %v300 = vsub.s32 5, %v299
    %v301 = vrot.slane %v230, %v300
    %v302 = vlaneseq
    %v303 = vshrl.u32 %v302, 7
    %v304 = vsub.s32 5, %v303
    %v305 = vrot.slane %v231, %v304
    %v306 = vmul.f32 %v301, %v237
    %v307 = vmul.f32 %v305, %v237
    %v308 = vadd.f32 %v296, %v306
    %v309 = vadd.f32 %v297, %v307
    %v310 = vlaneseq
    %v311 = vshrl.u32 %v310, 7
    %v312 = vsub.s32 6, %v311
    %v313 = vrot.slane %v230, %v312
    %v314 = vlaneseq
    %v315 = vshrl.u32 %v314, 7
    %v316 = vsub.s32 6, %v315
    %v317 = vrot.slane %v231, %v316
    %v318 = vmul.f32 %v313, %v238
    %v319 = vmul.f32 %v317, %v238
    %v320 = vadd.f32 %v308, %v318
    %v321 = vadd.f32 %v309, %v319
    %v322 = vlaneseq
    %v323 = vshrl.u32 %v322, 7
    %v324 = vsub.s32 7, %v323
    %v325 = vrot.slane %v230, %v324
    %v326 = vlaneseq
    %v327 = vshrl.u32 %v326, 7
    %v328 = vsub.s32 7, %v327
    %v329 = vrot.slane %v231, %v328
    %v330 = vmul.f32 %v325, %v239
    %v331 = vmul.f32 %v329, %v239
    %v332 = vadd.f32 %v320, %v330
    %v333 = vadd.f32 %v321, %v331
    %v334 = vlaneseq
    %v335 = vshrl.u32 %v334, 7
    %v336 = vsub.s32 2, %v335
    %v337 = vrot.slane %v90, %v336
    %v338 = vmul.f32 %v153, %v337
    %v339 = vmul.f32 %v154, %v337
    %v340 = vadd.f32 %v332, %v338
    %v341 = vadd.f32 %v333, %v339
    %v342 = vxor.u32 %v340, 2147483648
    %v343 = vxor.u32 %v341, 2147483648
    %v344 = vmul.f32 %v342, 1.442695
    %v345 = vpow.pop %v344
    %v346 = vmul.f32 %v343, 1.442695
    %v347 = vpow.pop %v346
    %v348 = vadd.f32 %v345, 1.0
    %v349 = vadd.f32 %v347, 1.0
    %v350 = vrcp.pop %v348
    %v351 = vmul.f32 1.0, %v350
    %v352 = vrcp.pop %v349
    %v353 = vmul.f32 1.0, %v352
    %v354 = vmul.f32 %v340, %v351
    %v355 = vmul.f32 %v341, %v353
    %v356 = vpack.c.bf16 %v355, %v354
    %v357 = vlaneseq
    %v358 = vshrl.u32 %v357, 7
    %v359 = vsub.s32 4, %v358
    %v360 = vrot.slane %v90, %v359
    %v361 = vlaneseq
    %v362 = vshrl.u32 %v361, 7
    %v363 = vsub.s32 4, %v362
    %v364 = vrot.slane %v91, %v363
    %v369 = vunpack.c.l.b16 %v97
    %v370 = vunpack.c.h.b16 %v97
    %v371 = vunpack.c.l.b16 %v99
    %v372 = vunpack.c.h.b16 %v99
    %v373 = vunpack.c.l.b16 %v101
    %v374 = vunpack.c.h.b16 %v101
    %v375 = vunpack.c.l.b16 %v103
    %v376 = vunpack.c.h.b16 %v103
    %v377 = vpack.c.b16 %v371, %v369
    %v378 = vpack.c.b16 %v372, %v370
    %v379 = vpack.c.b16 %v375, %v373
    %v380 = vpack.c.b16 %v376, %v374
    %v386 = vsel %vm115, %v356, 0
    %388 = vmatprep.subr.bf16.mxu0 0
    %389 = vmatpush1.bf16.msra.mxu0 0
    %390 = vmatprep.subr.bf16.mxu0 0
    %391 = vmatpush1.bf16.msra.mxu0 0
    %392 = vmatprep.subr.bf16.mxu0 0
    %393 = vmatpush1.bf16.msra.mxu0 0
    %394 = vmatprep.subr.bf16.mxu0 0
    %395 = vmatpush1.bf16.msra.mxu0 0
    %396 = vmatprep.subr.bf16.mxu0 0
    %397 = vmatpush1.bf16.msra.mxu0 0
    %398 = vmatprep.subr.bf16.mxu0 0
    %399 = vmatpush1.bf16.msra.mxu0 0
    %400 = vmatprep.subr.bf16.mxu0 %v380
    %401 = vmatpush1.bf16.msra.mxu0 %v379
    %402 = vmatprep.subr.bf16.mxu0 %v378
    %403 = vmatpush1.bf16.msra.mxu0 %v377
    %404 = vmatprep.subr.bf16.mxu0 0
    %405 = vmatpush2.bf16.msra.mxu0 0
    %406 = vmatprep.subr.bf16.mxu0 0
    %407 = vmatpush2.bf16.msra.mxu0 0
    %408 = vmatprep.subr.bf16.mxu0 0
    %409 = vmatpush2.bf16.msra.mxu0 0
    %410 = vmatprep.subr.bf16.mxu0 0
    %411 = vmatpush2.bf16.msra.mxu0 0
    %412 = vmatprep.subr.bf16.mxu0 0
    %413 = vmatpush2.bf16.msra.mxu0 0
    %414 = vmatprep.subr.bf16.mxu0 0
    %415 = vmatpush2.bf16.msra.mxu0 0
    %416 = vmatprep.subr.bf16.mxu0 0
    %417 = vmatpush2.bf16.msra.mxu0 0
    %418 = vmatprep.subr.bf16.mxu0 0
    %419 = vmatpush2.bf16.msra.mxu0 0
    %420 = vmatprep.mubr.bf16.mxu0 0
    %421 = vmatmul.mubr.bf16.gmra.mxu0 %v386
    %v422 = vpop.f32.mrf.mxu0
    %v423 = vadd.f32 %v360, %v422
    %v424 = vpop.f32.mrf.mxu0
    %v425 = vadd.f32 %v364, %v424
    %v426 = vpop.f32.mrf.mxu0
    %v427 = vadd.f32 %v360, %v426
    %v428 = vpop.f32.mrf.mxu0
    %v429 = vadd.f32 %v364, %v428
    %430 = vdwg.mxu0
    %v431 = vxor.u32 %v423, 2147483648
    %v432 = vxor.u32 %v427, 2147483648
    %v433 = vmul.f32 %v431, 1.442695
    %v434 = vpow.pop %v433
    %v435 = vmul.f32 %v432, 1.442695
    %v436 = vpow.pop %v435
    %v437 = vadd.f32 %v434, 1.0
    %v438 = vadd.f32 %v436, 1.0
    %v439 = vrcp.pop %v437
    %v440 = vmul.f32 1.0, %v439
    %v441 = vrcp.pop %v438
    %v442 = vmul.f32 1.0, %v441
    %v443 = vmul.f32 %v423, %v440
    %v444 = vmul.f32 %v427, %v442
    %v445 = vxor.u32 %v425, 2147483648
    %v446 = vxor.u32 %v429, 2147483648
    %v447 = vmul.f32 %v445, 1.442695
    %v448 = vpow.pop %v447
    %v449 = vmul.f32 %v446, 1.442695
    %v450 = vpow.pop %v449
    %v451 = vadd.f32 %v448, 1.0
    %v452 = vadd.f32 %v450, 1.0
    %v453 = vrcp.pop %v451
    %v454 = vmul.f32 1.0, %v453
    %v455 = vrcp.pop %v452
    %v456 = vmul.f32 1.0, %v455
    %v457 = vmul.f32 %v425, %v454
    %v458 = vmul.f32 %v429, %v456
    %v459 = vlaneseq
    %v460 = vshrl.u32 %v459, 7
    %v461 = vsub.s32 5, %v460
    %v462 = vrot.slane %v90, %v461
    %464 = vrot.lane.b32.xlu0 %v462, 32
    %v465 = vpop.permute.xlu0 %464
    %v467 = vmul.f32 %v443, %v465
    %v468 = vmul.f32 %v444, %v465
    %v469 = vlaneseq
    %v470 = vshrl.u32 %v469, 7
    %v471 = vsub.s32 7, %v470
    %v472 = vrot.slane %v90, %v471
    %474 = vrot.lane.b32.xlu0 %v472, 32
    %v475 = vpop.permute.xlu0 %474
    %v477 = vadd.f32 %v467, %v475
    %v478 = vadd.f32 %v468, %v475
    %v479 = vlaneseq
    %v480 = vshrl.u32 %v479, 7
    %v481 = vsub.s32 6, %v480
    %v482 = vrot.slane %v90, %v481
    %484 = vrot.lane.b32.xlu0 %v482, 32
    %v485 = vpop.permute.xlu0 %484
    %v487 = vmul.f32 %v443, %v485
    %v488 = vmul.f32 %v444, %v485
    %v489 = vlaneseq
    %v490 = vshrl.u32 %v489, 7
    %v491 = vsub.s32 0, %v490
    %v492 = vrot.slane %v92, %v491
    %494 = vrot.lane.b32.xlu0 %v492, 32
    %v495 = vpop.permute.xlu0 %494
    %v497 = vadd.f32 %v487, %v495
    %v498 = vadd.f32 %v488, %v495
    %v499 = vpack.c.bf16 %v478, %v477
    %v500 = vpack.c.bf16 %v498, %v497
    %502 = vrot.lane.b32.xlu0 %v499, 96
    %v503 = vpop.permute.xlu0 %502
    %505 = vrot.lane.b32.xlu0 %v500, 96
    %v506 = vpop.permute.xlu0 %505
    %vm507 = vcmask 130048
    %v509 = vsel %vm507, %v503, 0
    %v512 = vsel %vm507, %v506, 0
    %514 = vmatprep.subr.bf16.mxu0 0
    %515 = vmatpush1.bf16.xpose.msra.mxu0 0
    %516 = vmatprep.subr.bf16.mxu0 0
    %517 = vmatpush1.bf16.xpose.msra.mxu0 0
    %518 = vmatprep.subr.bf16.mxu0 0
    %519 = vmatpush1.bf16.xpose.msra.mxu0 0
    %520 = vmatprep.subr.bf16.mxu0 0
    %521 = vmatpush1.bf16.xpose.msra.mxu0 0
    %522 = vmatprep.subr.bf16.mxu0 0
    %523 = vmatpush1.bf16.xpose.msra.mxu0 0
    %524 = vmatprep.subr.bf16.mxu0 0
    %525 = vmatpush1.bf16.xpose.msra.mxu0 0
    %526 = vmatprep.subr.bf16.mxu0 0
    %527 = vmatpush1.bf16.xpose.msra.mxu0 0
    %528 = vmatprep.subr.bf16.mxu0 0
    %529 = vmatpush1.bf16.xpose.msra.mxu0 %v512
    %530 = vmatprep.subr.bf16.mxu0 0
    %531 = vmatpush2.bf16.xpose.msra.mxu0 0
    %532 = vmatprep.subr.bf16.mxu0 0
    %533 = vmatpush2.bf16.xpose.msra.mxu0 0
    %534 = vmatprep.subr.bf16.mxu0 0
    %535 = vmatpush2.bf16.xpose.msra.mxu0 0
    %536 = vmatprep.subr.bf16.mxu0 0
    %537 = vmatpush2.bf16.xpose.msra.mxu0 0
    %538 = vmatprep.subr.bf16.mxu0 0
    %539 = vmatpush2.bf16.xpose.msra.mxu0 0
    %540 = vmatprep.subr.bf16.mxu0 0
    %541 = vmatpush2.bf16.xpose.msra.mxu0 0
    %542 = vmatprep.subr.bf16.mxu0 0
    %543 = vmatpush2.bf16.xpose.msra.mxu0 0
    %544 = vmatprep.subr.bf16.mxu0 0
    %545 = vmatpush2.bf16.xpose.msra.mxu0 0
    %546 = vmatprep.mubr.bf16.mxu0 0
    %547 = vmatmul.mubr.bf16.gmra.mxu0 %v509
    %v548 = vpop.f32.mrf.mxu0
    %v549 = vadd.f32 %v93, %v548
    %v550 = vpop.f32.mrf.mxu0
    %v551 = vpop.f32.mrf.mxu0
    %v552 = vadd.f32 %v95, %v551
    %v553 = vpop.f32.mrf.mxu0
    %554 = vdwg.mxu0
    %v555 = vsel %vm507, %v549, -inf
    %556 = vmax.xlane.f32.xlu0 %v555
    %v557 = vpop.xlane.xlu0 %556
    %v558 = vsel %vm507, %v552, -inf
    %559 = vmax.xlane.f32.xlu0 %v558
    %v560 = vpop.xlane.xlu0 %559
    %v561 = vsub.f32 %v549, %v557
    %v562 = vsub.f32 %v552, %v560
    %v563 = vmul.f32 %v561, 1.442695
    %v564 = vpow.pop %v563
    %v565 = vmul.f32 %v562, 1.442695
    %v566 = vpow.pop %v565
    %v567 = vsel %vm507, %v564, 0.0
    %568 = vadd.xlane.f32.xlu0 %v567
    %v569 = vpop.xlane.xlu0 %568
    %v570 = vsel %vm507, %v566, 0.0
    %571 = vadd.xlane.f32.xlu0 %v570
    %v572 = vpop.xlane.xlu0 %571
    %v573 = vrcp.pop %v569
    %v574 = vrcp.pop %v572
    %v575 = vmul.f32 %v564, %v573
    %v576 = vmul.f32 %v566, %v574
    %v577 = vpack.c.bf16 %v576, %v575
    %v578 = vpack.c.bf16 %v229, %v228
    %v580 = vsel %vm507, %v577, 0
    %582 = vmatprep.subr.bf16.mxu0 0
    %583 = vmatpush1.bf16.msra.mxu0 0
    %584 = vmatprep.subr.bf16.mxu0 0
    %585 = vmatpush1.bf16.msra.mxu0 0
    %586 = vmatprep.subr.bf16.mxu0 0
    %587 = vmatpush1.bf16.msra.mxu0 0
    %588 = vmatprep.subr.bf16.mxu0 0
    %589 = vmatpush1.bf16.msra.mxu0 0
    %590 = vmatprep.subr.bf16.mxu0 0
    %591 = vmatpush1.bf16.msra.mxu0 0
    %592 = vmatprep.subr.bf16.mxu0 0
    %593 = vmatpush1.bf16.msra.mxu0 0
    %594 = vmatprep.subr.bf16.mxu0 0
    %595 = vmatpush1.bf16.msra.mxu0 0
    %596 = vmatprep.subr.bf16.mxu0 0
    %597 = vmatpush1.bf16.msra.mxu0 %v578
    %598 = vmatprep.subr.bf16.mxu0 0
    %599 = vmatpush2.bf16.msra.mxu0 0
    %600 = vmatprep.subr.bf16.mxu0 0
    %601 = vmatpush2.bf16.msra.mxu0 0
    %602 = vmatprep.subr.bf16.mxu0 0
    %603 = vmatpush2.bf16.msra.mxu0 0
    %604 = vmatprep.subr.bf16.mxu0 0
    %605 = vmatpush2.bf16.msra.mxu0 0
    %606 = vmatprep.subr.bf16.mxu0 0
    %607 = vmatpush2.bf16.msra.mxu0 0
    %608 = vmatprep.subr.bf16.mxu0 0
    %609 = vmatpush2.bf16.msra.mxu0 0
    %610 = vmatprep.subr.bf16.mxu0 0
    %611 = vmatpush2.bf16.msra.mxu0 0
    %612 = vmatprep.subr.bf16.mxu0 0
    %613 = vmatpush2.bf16.msra.mxu0 0
    %614 = vmatprep.mubr.bf16.mxu0 0
    %615 = vmatmul.mubr.bf16.gmra.mxu0 %v580
    %v616 = vpop.f32.mrf.mxu0
    %v617 = vadd.f32 0.0, %v616
    %v618 = vpop.f32.mrf.mxu0
    %v619 = vpop.f32.mrf.mxu0
    %v620 = vadd.f32 0.0, %v619
    %v621 = vpop.f32.mrf.mxu0
    %622 = vdwg.mxu0
    %v623 = vmul.f32 %v617, %v457
    %v624 = vmul.f32 %v620, %v458
    %v625 = vpack.c.bf16 %v624, %v623
    %v634 = vunpack.c.l.b16 %v105
    %v635 = vunpack.c.l.b16 %v106
    %v636 = vunpack.c.l.b16 %v107
    %v637 = vunpack.c.l.b16 %v108
    %v638 = vunpack.c.l.b16 %v109
    %v639 = vunpack.c.l.b16 %v110
    %v640 = vunpack.c.l.b16 %v111
    %v641 = vunpack.c.l.b16 %v112
    %v642 = vpack.c.b16 %v635, %v634
    %v643 = vpack.c.b16 %v637, %v636
    %v644 = vpack.c.b16 %v639, %v638
    %v645 = vpack.c.b16 %v641, %v640
    %vm650 = vcmask 523264
    %v652 = vsel %vm650, %v625, 0
    %654 = vmatprep.subr.bf16.mxu0 0
    %655 = vmatpush1.bf16.msra.mxu0 0
    %656 = vmatprep.subr.bf16.mxu0 0
    %657 = vmatpush1.bf16.msra.mxu0 0
    %658 = vmatprep.subr.bf16.mxu0 0
    %659 = vmatpush1.bf16.msra.mxu0 0
    %660 = vmatprep.subr.bf16.mxu0 0
    %661 = vmatpush1.bf16.msra.mxu0 0
    %662 = vmatprep.subr.bf16.mxu0 0
    %663 = vmatpush1.bf16.msra.mxu0 %v645
    %664 = vmatprep.subr.bf16.mxu0 0
    %665 = vmatpush1.bf16.msra.mxu0 %v644
    %666 = vmatprep.subr.bf16.mxu0 0
    %667 = vmatpush1.bf16.msra.mxu0 %v643
    %668 = vmatprep.subr.bf16.mxu0 0
    %669 = vmatpush1.bf16.msra.mxu0 %v642
    %670 = vmatprep.subr.bf16.mxu0 0
    %671 = vmatpush2.bf16.msra.mxu0 0
    %672 = vmatprep.subr.bf16.mxu0 0
    %673 = vmatpush2.bf16.msra.mxu0 0
    %674 = vmatprep.subr.bf16.mxu0 0
    %675 = vmatpush2.bf16.msra.mxu0 0
    %676 = vmatprep.subr.bf16.mxu0 0
    %677 = vmatpush2.bf16.msra.mxu0 0
    %678 = vmatprep.subr.bf16.mxu0 0
    %679 = vmatpush2.bf16.msra.mxu0 0
    %680 = vmatprep.subr.bf16.mxu0 0
    %681 = vmatpush2.bf16.msra.mxu0 0
    %682 = vmatprep.subr.bf16.mxu0 0
    %683 = vmatpush2.bf16.msra.mxu0 0
    %684 = vmatprep.subr.bf16.mxu0 0
    %685 = vmatpush2.bf16.msra.mxu0 0
    %686 = vmatprep.mubr.bf16.mxu0 0
    %687 = vmatmul.mubr.bf16.gmra.mxu0 %v652
    %v688 = vpop.f32.mrf.mxu0
    %v689 = vadd.f32 0.0, %v688
    %v690 = vpop.f32.mrf.mxu0
    %v691 = vpop.f32.mrf.mxu0
    %v692 = vadd.f32 0.0, %v691
    %v693 = vpop.f32.mrf.mxu0
    %694 = vdwg.mxu0
    %697 = vrot.lane.b32.xlu0 %v689, 48
    %v698 = vpop.permute.xlu0 %697
    %699 = vrot.lane.b32.xlu0 %v692, 48
    %v700 = vpop.permute.xlu0 %699
    %v703 = vadd.f32 %v423, %v698
    %v704 = vadd.f32 %v427, %v700
    %v705 = vlaneseq
    %v706 = vshrl.u32 %v705, 7
    %v707 = vsub.s32 1, %v706
    %v708 = vrot.slane %v92, %v707
    %710 = vrot.lane.b32.xlu0 %v708, 48
    %v711 = vpop.permute.xlu0 %710
    %v713 = vadd.f32 %v703, %v711
    %v714 = vadd.f32 %v704, %v711
    %v715 = vxor.u32 %v713, 2147483648
    %v716 = vxor.u32 %v714, 2147483648
    %v717 = vmul.f32 %v715, 1.442695
    %v718 = vpow.pop %v717
    %v719 = vmul.f32 %v716, 1.442695
    %v720 = vpow.pop %v719
    %v721 = vadd.f32 %v718, 1.0
    %v722 = vadd.f32 %v720, 1.0
    %v723 = vrcp.pop %v721
    %v724 = vmul.f32 1.0, %v723
    %v725 = vrcp.pop %v722
    %v726 = vmul.f32 1.0, %v725
    %v727 = vmul.f32 %v713, %v724
    %v728 = vmul.f32 %v714, %v726
    %731 = vrot.lane.b32.xlu0 %v113, 48
    %v732 = vpop.permute.xlu0 %731
    %733 = vrot.lane.b32.xlu0 %v114, 48
    %v734 = vpop.permute.xlu0 %733
    %v737 = vsub.f32 %v727, %v732
    %v738 = vsub.f32 %v728, %v734
    %741 = vrot.lane.b32.xlu0 %v737, 80
    %v742 = vpop.permute.xlu0 %741
    %743 = vrot.lane.b32.xlu0 %v738, 80
    %v744 = vpop.permute.xlu0 %743
    %v747 = vmul.f32 %v440, %v742
    %v748 = vmul.f32 %v442, %v744
    %v749 = vadd.f32 %v113, %v747
    %v750 = vadd.f32 %v114, %v748
    %v751 = vsel %vm115, %v749, 0.0
    %752 = vadd.xlane.f32.xlu0 %v751
    %v753 = vpop.xlane.xlu0 %752
    %v754 = vsel %vm115, %v750, 0.0
    %755 = vadd.xlane.f32.xlu0 %v754
    %v756 = vpop.xlane.xlu0 %755
    %v757 = vmul.f32 %v753, %v122
    %v758 = vmul.f32 %v756, %v122
    %v759 = vsub.f32 %v749, %v757
    %v760 = vsub.f32 %v750, %v758
    %v761 = vmul.f32 %v759, %v759
    %v762 = vmul.f32 %v760, %v760
    %v763 = vsel %vm115, %v761, 0.0
    %764 = vadd.xlane.f32.xlu0 %v763
    %v765 = vpop.xlane.xlu0 %764
    %v766 = vsel %vm115, %v762, 0.0
    %767 = vadd.xlane.f32.xlu0 %v766
    %v768 = vpop.xlane.xlu0 %767
    %v769 = vmul.f32 %v765, %v122
    %v770 = vmul.f32 %v768, %v122
    %v771 = vadd.f32 %v769, 1e-05
    %v772 = vadd.f32 %v770, 1e-05
    %v773 = vrsqrt.pop %v771
    %v774 = vrsqrt.pop %v772
    %v775 = vmul.f32 %v759, %v773
    %v776 = vmul.f32 %v760, %v774
    %v777 = vlaneseq
    %v778 = vshrl.u32 %v777, 7
    %v779 = vsub.s32 2, %v778
    %v780 = vrot.slane %v92, %v779
    %v781 = vmul.f32 %v775, %v780
    %v782 = vmul.f32 %v776, %v780
    %v783 = vlaneseq
    %v784 = vshrl.u32 %v783, 7
    %v785 = vsub.s32 3, %v784
    %v786 = vrot.slane %v92, %v785
    %v787 = vadd.f32 %v781, %v786
    %v788 = vadd.f32 %v782, %v786
    %v789 = vpack.c.bf16 %v788, %v787
    %v790 = vlaneseq
    %v791 = vshrl.u32 %v790, 7
    %v792 = vsub.s32 4, %v791
    %v793 = vrot.slane %v92, %v792
    %794 = vrot.lane.b32.xlu0 %v378, 64
    %v795 = vpop.permute.xlu0 %794
    %796 = vrot.lane.b32.xlu0 %v380, 64
    %v797 = vpop.permute.xlu0 %796
    %v801 = vsel %vm115, %v789, 0
    %803 = vmatprep.subr.bf16.mxu0 0
    %804 = vmatpush1.bf16.msra.mxu0 0
    %805 = vmatprep.subr.bf16.mxu0 0
    %806 = vmatpush1.bf16.msra.mxu0 0
    %807 = vmatprep.subr.bf16.mxu0 0
    %808 = vmatpush1.bf16.msra.mxu0 0
    %809 = vmatprep.subr.bf16.mxu0 0
    %810 = vmatpush1.bf16.msra.mxu0 0
    %811 = vmatprep.subr.bf16.mxu0 0
    %812 = vmatpush1.bf16.msra.mxu0 0
    %813 = vmatprep.subr.bf16.mxu0 0
    %814 = vmatpush1.bf16.msra.mxu0 0
    %815 = vmatprep.subr.bf16.mxu0 0
    %816 = vmatpush1.bf16.msra.mxu0 %v797
    %817 = vmatprep.subr.bf16.mxu0 0
    %818 = vmatpush1.bf16.msra.mxu0 %v795
    %819 = vmatprep.subr.bf16.mxu0 0
    %820 = vmatpush2.bf16.msra.mxu0 0
    %821 = vmatprep.subr.bf16.mxu0 0
    %822 = vmatpush2.bf16.msra.mxu0 0
    %823 = vmatprep.subr.bf16.mxu0 0
    %824 = vmatpush2.bf16.msra.mxu0 0
    %825 = vmatprep.subr.bf16.mxu0 0
    %826 = vmatpush2.bf16.msra.mxu0 0
    %827 = vmatprep.subr.bf16.mxu0 0
    %828 = vmatpush2.bf16.msra.mxu0 0
    %829 = vmatprep.subr.bf16.mxu0 0
    %830 = vmatpush2.bf16.msra.mxu0 0
    %831 = vmatprep.subr.bf16.mxu0 0
    %832 = vmatpush2.bf16.msra.mxu0 0
    %833 = vmatprep.subr.bf16.mxu0 0
    %834 = vmatpush2.bf16.msra.mxu0 0
    %835 = vmatprep.mubr.bf16.mxu0 0
    %836 = vmatmul.mubr.bf16.gmra.mxu0 %v801
    %v837 = vpop.f32.mrf.mxu0
    %v838 = vadd.f32 %v793, %v837
    %v839 = vpop.f32.mrf.mxu0
    %v840 = vpop.f32.mrf.mxu0
    %v841 = vadd.f32 %v793, %v840
    %v842 = vpop.f32.mrf.mxu0
    %843 = vdwg.mxu0
    %v844 = vxor.u32 %v838, 2147483648
    %v845 = vxor.u32 %v841, 2147483648
    %v846 = vmul.f32 %v844, 1.442695
    %v847 = vpow.pop %v846
    %v848 = vmul.f32 %v845, 1.442695
    %v849 = vpow.pop %v848
    %v850 = vadd.f32 %v847, 1.0
    %v851 = vadd.f32 %v849, 1.0
    %v852 = vrcp.pop %v850
    %v853 = vmul.f32 1.0, %v852
    %v854 = vrcp.pop %v851
    %v855 = vmul.f32 1.0, %v854
    %v856 = vmul.f32 %v838, %v853
    %v857 = vmul.f32 %v841, %v855
    %v858 = vpack.c.bf16 %v857, %v856
    %v859 = vlaneseq
    %v860 = vshrl.u32 %v859, 7
    %v861 = vsub.s32 5, %v860
    %v862 = vrot.slane %v92, %v861
    %863 = vrot.lane.b32.xlu0 %v642, 96
    %v864 = vpop.permute.xlu0 %863
    %865 = vrot.lane.b32.xlu0 %v643, 96
    %v866 = vpop.permute.xlu0 %865
    %867 = vrot.lane.b32.xlu0 %v644, 96
    %v868 = vpop.permute.xlu0 %867
    %869 = vrot.lane.b32.xlu0 %v645, 96
    %v870 = vpop.permute.xlu0 %869
    %v876 = vsel %vm650, %v858, 0
    %878 = vmatprep.subr.bf16.mxu0 0
    %879 = vmatpush1.bf16.msra.mxu0 0
    %880 = vmatprep.subr.bf16.mxu0 0
    %881 = vmatpush1.bf16.msra.mxu0 0
    %882 = vmatprep.subr.bf16.mxu0 0
    %883 = vmatpush1.bf16.msra.mxu0 0
    %884 = vmatprep.subr.bf16.mxu0 0
    %885 = vmatpush1.bf16.msra.mxu0 0
    %886 = vmatprep.subr.bf16.mxu0 0
    %887 = vmatpush1.bf16.msra.mxu0 %v870
    %888 = vmatprep.subr.bf16.mxu0 0
    %889 = vmatpush1.bf16.msra.mxu0 %v868
    %890 = vmatprep.subr.bf16.mxu0 0
    %891 = vmatpush1.bf16.msra.mxu0 %v866
    %892 = vmatprep.subr.bf16.mxu0 0
    %893 = vmatpush1.bf16.msra.mxu0 %v864
    %894 = vmatprep.subr.bf16.mxu0 0
    %895 = vmatpush2.bf16.msra.mxu0 0
    %896 = vmatprep.subr.bf16.mxu0 0
    %897 = vmatpush2.bf16.msra.mxu0 0
    %898 = vmatprep.subr.bf16.mxu0 0
    %899 = vmatpush2.bf16.msra.mxu0 0
    %900 = vmatprep.subr.bf16.mxu0 0
    %901 = vmatpush2.bf16.msra.mxu0 0
    %902 = vmatprep.subr.bf16.mxu0 0
    %903 = vmatpush2.bf16.msra.mxu0 0
    %904 = vmatprep.subr.bf16.mxu0 0
    %905 = vmatpush2.bf16.msra.mxu0 0
    %906 = vmatprep.subr.bf16.mxu0 0
    %907 = vmatpush2.bf16.msra.mxu0 0
    %908 = vmatprep.subr.bf16.mxu0 0
    %909 = vmatpush2.bf16.msra.mxu0 0
    %910 = vmatprep.mubr.bf16.mxu0 0
    %911 = vmatmul.mubr.bf16.gmra.mxu0 %v876
    %v912 = vpop.f32.mrf.mxu0
    %v913 = vadd.f32 %v862, %v912
    %v914 = vpop.f32.mrf.mxu0
    %v915 = vpop.f32.mrf.mxu0
    %v916 = vadd.f32 %v862, %v915
    %v917 = vpop.f32.mrf.mxu0
    %918 = vdwg.mxu0
    %v919 = vadd.f32 %v913, %v749
    %v920 = vadd.f32 %v916, %v750
    %921 = vst.msk [vmem:[#allocation11] sm:$0xff] %vm115, %v919
    %922 = vst.msk [vmem:[#allocation11 + $0x8] sm:$0xff] %vm115, %v920
    // Predicated region
    $region42: #{tpu_custom_call.1} parent=1 // pred_check
      _
    $region43: #{tpu_custom_call.1} parent=1 // pred_check_branch
      %924 = sbr.rel (0) target = $region45
    $region44: #{tpu_custom_call.1} parent=1 // pred_region
      %s926 = ssub.s32 256, 256
      %927 = vsyncadd [#allocation4], %s926
      %s928 = sshll.u32 [#allocation11], 4
      %s929 = int_to_ptr.vmem [resolvable:$true] %s928
      %934 = dma.vmem_to_hbm [thread:$0]  %s929, 256, %s5, [#allocation4], 128, 128, 8
    $region45: #{tpu_custom_call.1} parent=1 // pred_fallthru
      _
    // Predicated region
    $region46: #{tpu_custom_call.1} parent=1 // pred_check
      _
    $region47: #{tpu_custom_call.1} parent=1 // pred_check_branch
      %936 = sbr.rel (0) target = $region49
    $region48: #{tpu_custom_call.1} parent=1 // pred_region
      %937 = dma.done [#allocation4], 256
    $region49: #{tpu_custom_call.1} parent=1 // pred_fallthru
      _
    %938 = vsyncpa [#allocation3], 1
    %939 = vsyncpa [#allocation6], 1
    %940 = vsyncpa [#allocation9], 1
    %941 = vsyncpa [#allocation4], 1

</llo_original>
